<compile_context>
chip_gen: v7x
topology: tpu7x:2x2x1
jax: 0.10.0
libtpu: 0.0.40
codegen_flags: <defaults>
</compile_context>

<pallas_src>
import functools
import math

import jax
import jax.numpy as jnp
from jax.experimental import pallas as pl
from jax.experimental.pallas import tpu as pltpu

_SUBLANE = {4: 8, 2: 16, 1: 32}   # sublane tile by itemsize
_LANE = 128


def _round_up(x: int, m: int) -> int:
    return (x + m - 1) // m * m


def _cdiv(a: int, b: int) -> int:
    return (a + b - 1) // b


# --------------------------------------------------------------------------- #
# 1-D interpolation matrices (PyTorch F.interpolate index/weight computation). #
# --------------------------------------------------------------------------- #
def _interp_matrix(in_size, out_size, align_corners, scale_factor=None):
    """(out_size, in_size) linear-interpolation matrix matching PyTorch."""
    o = jnp.arange(out_size, dtype=jnp.float32)
    if align_corners:
        scale = (in_size - 1) / (out_size - 1) if out_size > 1 else 0.0
        src = o * scale
    else:
        # recompute_scale_factor=False semantics: use 1/scale_factor when provided.
        step = (1.0 / scale_factor) if scale_factor else (in_size / out_size)
        src = (o + 0.5) * step - 0.5
        src = jnp.maximum(src, 0.0)          # PyTorch clamps negative source coords
    i0 = jnp.clip(jnp.floor(src).astype(jnp.int32), 0, in_size - 1)
    i1 = jnp.minimum(i0 + 1, in_size - 1)
    w1 = src - i0.astype(jnp.float32)
    w0 = 1.0 - w1
    rows = jnp.arange(out_size)
    m = jnp.zeros((out_size, in_size), dtype=jnp.float32)
    m = m.at[rows, i0].add(w0)
    m = m.at[rows, i1].add(w1)
    return m


# --------------------------------------------------------------------------- #
# Planning: per-step channel batch, grid, VMEM limit, cost estimate.           #
# --------------------------------------------------------------------------- #
def _vmem_limit_bytes() -> int:
    try:
        cap = pltpu.get_tpu_info().vmem_capacity_bytes
    except Exception:
        cap = 64 << 20
    # 128-MiB parts (v5e/v6e): raise the scoped limit; 64-MiB parts (v7x): keep 32 MiB.
    return (64 << 20) if cap >= (100 << 20) else (32 << 20)


def _pick_block_channels(nc, h_in, w_in, h_out, w_out, itemsize, budget_bytes,
                         max_channels=64):
    """Channels per grid step, sized against the PADDED per-step VMEM working set."""
    sub = _SUBLANE.get(itemsize, 8)
    in_b = h_in * _round_up(w_in, _LANE) * itemsize              # input rows / channel
    out_b = _round_up(h_out * w_out, _LANE) * itemsize           # lane-dense output row
    mid_b = 4 * (h_in * _round_up(w_out, _LANE)                  # t             (f32)
                 + w_out * _round_up(h_in, _LANE)                # t, H in lanes (f32)
                 + w_out * _round_up(h_out, _LANE)               # o             (f32)
                 + _round_up(h_out * w_out, _LANE))              # o, lane-dense (f32)
    per_channel = 2 * (in_b + out_b) + mid_b                     # in/out double-buffered
    tc = max(budget_bytes // per_channel, 1)
    tc = min(tc, max_channels, nc)
    if nc >= 4:
        tc = min(tc, _cdiv(nc, 4))     # >= 4 grid steps (>= 2 per TensorCore on v7x)
    if tc < nc:
        # Sublane alignment: output block second-minor dim is `tc`, input block
        # second-minor dim is `tc*h_in`; keep both tile-aligned (or use full blocks).
        tc = (tc // sub) * sub if tc >= sub else min(sub, nc)
    if tc < nc and (tc % sub or (tc * h_in) % sub):
        tc = nc                        # full-extent blocks are always legal
    return max(int(tc), 1)


def _plan(shape, dtype, scale_factor):
    n, c, h_in, w_in = shape
    h_out = int(math.floor(h_in * scale_factor))
    w_out = int(math.floor(w_in * scale_factor))
    nc = n * c
    itemsize = jnp.dtype(dtype).itemsize
    vmem_limit = _vmem_limit_bytes()
    tc = _pick_block_channels(nc, h_in, w_in, h_out, w_out, itemsize, vmem_limit // 2)
    grid = (_cdiv(nc, tc),)
    cost = pl.CostEstimate(
        flops=2 * nc * h_in * w_out * (w_in + h_out),
        transcendentals=0,
        bytes_accessed=(nc * (h_in * w_in + h_out * w_out)
                        + h_in * h_out + w_in * w_out) * itemsize,
    )
    return nc, h_out, w_out, tc, grid, vmem_limit, cost


# --------------------------------------------------------------------------- #
# Kernels.                                                                      #
# --------------------------------------------------------------------------- #
def _interp_kernel_opt(at_ref, bt_ref, x_ref, o_ref, *, tc, h_in, h_out, w_out):
    """Optimized path: two wide MXU matmuls + XLU reorders, lane-dense output slab.

    at_ref: (h_in, h_out)   f32      A^T         (grid-invariant)
    bt_ref: (w_in, w_out)   x.dtype  B^T         (grid-invariant)
    x_ref : (tc*h_in, w_in)          input slab  (tc channels)
    o_ref : (tc, h_out*w_out)        lane-dense output slab
    """
    x = x_ref[...]
    # W interpolation: ONE wide MXU matmul over the whole channel batch (f32 acc).
    t = jnp.dot(x, bt_ref[...], preferred_element_type=jnp.float32)    # (tc*h_in, w_out)
    # Bring H into the lane (contraction) dim: batched minor transpose (XLU slot).
    t = jnp.transpose(t.reshape(tc, h_in, w_out), (0, 2, 1))           # (tc, w_out, h_in)
    t = t.reshape(tc * w_out, h_in)
    # H interpolation: ONE wide MXU matmul, kept in f32 (PyTorch fp32 op-math).
    o = jnp.dot(t, at_ref[...], preferred_element_type=jnp.float32)    # (tc*w_out, h_out)
    # Back to NCHW order, lane-dense slab so stores are unmasked vst.
    o = jnp.transpose(o.reshape(tc, w_out, h_out), (0, 2, 1))          # (tc, h_out, w_out)
    o_ref[...] = o.reshape(tc, h_out * w_out).astype(o_ref.dtype)


def _interp_kernel_safe(a_ref, bt_ref, x_ref, o_ref, *, tc, h_in, h_out):
    """Conservative fallback (proven lowering): wide W-matmul + per-channel H-matmuls.

    a_ref : (h_out, h_in)   f32      A           (grid-invariant)
    bt_ref: (w_in, w_out)   x.dtype  B^T         (grid-invariant)
    x_ref : (tc*h_in, w_in)          input slab
    o_ref : (tc, h_out, w_out)
    """
    t = jnp.dot(x_ref[...], bt_ref[...], preferred_element_type=jnp.float32)
    a = a_ref[...]
    for ch in range(tc):
        t_ch = t[ch * h_in:(ch + 1) * h_in, :]                          # static slice
        o_ref[ch] = jnp.dot(a, t_ch,
                            preferred_element_type=jnp.float32).astype(o_ref.dtype)


# --------------------------------------------------------------------------- #
# Wrappers.                                                                     #
# --------------------------------------------------------------------------- #
@functools.partial(jax.jit, static_argnames=("scale_factor", "align_corners"))
def _interpolate_opt(x, *, scale_factor, align_corners):
    n, c, h_in, w_in = x.shape
    nc, h_out, w_out, tc, grid, vmem_limit, cost = _plan(x.shape, x.dtype, scale_factor)

    at = _interp_matrix(h_in, h_out, align_corners, scale_factor).T            # (h_in, h_out) f32
    bt = _interp_matrix(w_in, w_out, align_corners, scale_factor).T.astype(x.dtype)
    x2d = x.reshape(nc * h_in, w_in)                                           # free, contiguous

    kernel = functools.partial(_interp_kernel_opt, tc=tc, h_in=h_in,
                               h_out=h_out, w_out=w_out)
    out = pl.pallas_call(
        kernel,
        out_shape=jax.ShapeDtypeStruct((nc, h_out * w_out), x.dtype),
        grid_spec=pltpu.PrefetchScalarGridSpec(
            num_scalar_prefetch=0,
            grid=grid,
            in_specs=[
                pl.BlockSpec((h_in, h_out), lambda i: (0, 0)),       # A^T, fetched once
                pl.BlockSpec((w_in, w_out), lambda i: (0, 0)),       # B^T, fetched once
                pl.BlockSpec((tc * h_in, w_in), lambda i: (i, 0)),   # x slab
            ],
            out_specs=pl.BlockSpec((tc, h_out * w_out), lambda i: (i, 0)),
        ),
        compiler_params=pltpu.CompilerParams(
            dimension_semantics=("parallel",),
            vmem_limit_bytes=vmem_limit,
        ),
        cost_estimate=cost,
    )(at, bt, x2d)
    return out.reshape(n, c, h_out, w_out)


@functools.partial(jax.jit, static_argnames=("scale_factor", "align_corners"))
def _interpolate_safe(x, *, scale_factor, align_corners):
    n, c, h_in, w_in = x.shape
    nc, h_out, w_out, tc, grid, vmem_limit, cost = _plan(x.shape, x.dtype, scale_factor)

    a = _interp_matrix(h_in, h_out, align_corners, scale_factor)               # (h_out, h_in) f32
    bt = _interp_matrix(w_in, w_out, align_corners, scale_factor).T.astype(x.dtype)
    x2d = x.reshape(nc * h_in, w_in)

    kernel = functools.partial(_interp_kernel_safe, tc=tc, h_in=h_in, h_out=h_out)
    out = pl.pallas_call(
        kernel,
        out_shape=jax.ShapeDtypeStruct((nc, h_out, w_out), x.dtype),
        grid_spec=pltpu.PrefetchScalarGridSpec(
            num_scalar_prefetch=0,
            grid=grid,
            in_specs=[
                pl.BlockSpec((h_out, h_in), lambda i: (0, 0)),
                pl.BlockSpec((w_in, w_out), lambda i: (0, 0)),
                pl.BlockSpec((tc * h_in, w_in), lambda i: (i, 0)),
            ],
            out_specs=pl.BlockSpec((tc, h_out, w_out), lambda i: (i, 0, 0)),
        ),
        compiler_params=pltpu.CompilerParams(
            dimension_semantics=("parallel",),
            vmem_limit_bytes=vmem_limit,
        ),
        cost_estimate=cost,
    )(a, bt, x2d)
    return out.reshape(n, c, h_out, w_out)


_PATH_CACHE = {}   # (shape, dtype, scale, align_corners) -> use optimized kernel?


def interpolate(x, scale_factor=2.0, mode="bilinear", align_corners=False):
    """Pallas equivalent of Interpolate.forward for NCHW input `x`."""
    if mode not in ("bilinear", "linear"):
        # TODO(synk): only (bi)linear mode implemented; nearest/bicubic not needed here.
        raise NotImplementedError(f"mode={mode!r} not implemented")
    sf = float(scale_factor)
    ac = bool(align_corners)
    key = (tuple(x.shape), str(x.dtype), sf, ac)
    use_opt = _PATH_CACHE.get(key)
    if use_opt is None:
        try:
            out = _interpolate_opt(x, scale_factor=sf, align_corners=ac)
            out = jax.block_until_ready(out)
            _PATH_CACHE[key] = True
            return out
        except Exception:
            # Local Mosaic toolchain rejected the batched-transpose / lane-merge path;
            # use the conservative kernel instead (identical numerics).
            _PATH_CACHE[key] = False
            return _interpolate_safe(x, scale_factor=sf, align_corners=ac)
    if use_opt:
        return _interpolate_opt(x, scale_factor=sf, align_corners=ac)
    return _interpolate_safe(x, scale_factor=sf, align_corners=ac)


if __name__ == "__main__":
    key = jax.random.PRNGKey(0)
    x = jax.random.normal(key, (2, 4, 16, 16), dtype=jnp.float32)

    out = interpolate(x, scale_factor=2.0, mode="bilinear", align_corners=False)
    out = jax.block_until_ready(out)
    assert out.shape == (2, 4, 32, 32), out.shape

    # Pure-JAX reference (same separable bilinear formulation) for correctness.
    a_ref = _interp_matrix(16, 32, False, 2.0)
    b_ref = _interp_matrix(16, 32, False, 2.0)
    ref = jnp.einsum("oh,nchw,pw->ncop", a_ref, x, b_ref)
    assert jnp.allclose(out, ref, atol=1e-5, rtol=1e-5), \
        float(jnp.max(jnp.abs(out - ref)))

    print("KERNEL_OK")
</pallas_src>

<mosaic_0001>
module attributes {stable_mosaic.version = 11 : i64} {
  func.func private @main(%arg0: i32) attributes {dimension_semantics = [#tpu.dimension_semantics<core_parallel>], iteration_bounds = array<i64: 2>, tpu.core_type = #tpu.core_type<sc_scalar_subcore>, window_params = []} {
    return
  }
}

module attributes {stable_mosaic.version = 11 : i64} {
  func.func private @main(%arg0: i32) attributes {dimension_semantics = [#tpu.dimension_semantics<core_parallel>], iteration_bounds = array<i64: 2>, tpu.core_type = #tpu.core_type<sc_scalar_subcore>, window_params = []} {
    return
  }
}

module attributes {stable_mosaic.version = 11 : i64} {
  func.func @_interp_kernel_opt(%arg0: i32, %arg1: memref<16x32xf32, #tpu.memory_space<vmem>>, %arg2: memref<16x32xf32, #tpu.memory_space<vmem>>, %arg3: memref<128x16xf32, #tpu.memory_space<vmem>>, %arg4: memref<8x1024xf32, #tpu.memory_space<vmem>>) attributes {dimension_semantics = [#tpu.dimension_semantics<parallel>], iteration_bounds = array<i64: 1>, scalar_prefetch = 0 : i64, scratch_operands = 0 : i64, tpu.core_type = #tpu.core_type<tc>, window_params = [{pipeline_mode = #tpu.pipeline_mode<synchronous>, transform_indices = @transform_0, window_bounds = array<i64: 16, 32>}, {pipeline_mode = #tpu.pipeline_mode<synchronous>, transform_indices = @transform_1, window_bounds = array<i64: 16, 32>}, {transform_indices = @transform_2, window_bounds = array<i64: 128, 16>}, {transform_indices = @transform_3, window_bounds = array<i64: 8, 1024>}]} {
    %c0 = arith.constant 0 : index
    %c0_0 = arith.constant 0 : index
    %0 = vector.load %arg3[%c0, %c0_0] : memref<128x16xf32, #tpu.memory_space<vmem>>, vector<128x16xf32>
    %c0_1 = arith.constant 0 : index
    %c0_2 = arith.constant 0 : index
    %1 = vector.load %arg2[%c0_1, %c0_2] : memref<16x32xf32, #tpu.memory_space<vmem>>, vector<16x32xf32>
    %cst = arith.constant dense<0.000000e+00> : vector<128x32xf32>
    %2 = tpu.matmul %0, %1, %cst {dimension_numbers = #tpu.dot_dimension_numbers<[1], [0], [0], [1], [0, 0, 1, 1], [], []>} : vector<128x16xf32>, vector<16x32xf32>, vector<128x32xf32> -> vector<128x32xf32>
    %3 = vector.shape_cast %2 : vector<128x32xf32> to vector<8x16x32xf32>
    %4 = tpu.transpose %3, [0, 2, 1] : vector<8x16x32xf32> -> vector<8x32x16xf32>
    %5 = vector.shape_cast %4 : vector<8x32x16xf32> to vector<256x16xf32>
    %c0_3 = arith.constant 0 : index
    %c0_4 = arith.constant 0 : index
    %6 = vector.load %arg1[%c0_3, %c0_4] : memref<16x32xf32, #tpu.memory_space<vmem>>, vector<16x32xf32>
    %cst_5 = arith.constant dense<0.000000e+00> : vector<256x32xf32>
    %7 = tpu.matmul %5, %6, %cst_5 {dimension_numbers = #tpu.dot_dimension_numbers<[1], [0], [0], [1], [0, 0, 1, 1], [], []>} : vector<256x16xf32>, vector<16x32xf32>, vector<256x32xf32> -> vector<256x32xf32>
    %8 = vector.shape_cast %7 : vector<256x32xf32> to vector<8x32x32xf32>
    %9 = tpu.transpose %8, [0, 2, 1] : vector<8x32x32xf32> -> vector<8x32x32xf32>
    %10 = vector.shape_cast %9 : vector<8x32x32xf32> to vector<8x1024xf32>
    %c0_6 = arith.constant 0 : index
    %c0_7 = arith.constant 0 : index
    %11 = vector.load %arg4[%c0_6, %c0_7] : memref<8x1024xf32, #tpu.memory_space<vmem>>, vector<8x1024xf32>
    tpu.vector_store %arg4[%c0_6, %c0_7], %10 {strides = array<i32>} : memref<8x1024xf32, #tpu.memory_space<vmem>>, vector<8x1024xf32>,
    return
  }
  func.func @transform_0(%arg0: i32) -> (i32, i32) {
    %c0_i32 = arith.constant 0 : i32
    %c0_i32_0 = arith.constant 0 : i32
    %c0_i32_1 = arith.constant 0 : i32
    return %c0_i32, %c0_i32_0 : i32, i32
  }
  func.func @transform_1(%arg0: i32) -> (i32, i32) {
    %c0_i32 = arith.constant 0 : i32
    %c0_i32_0 = arith.constant 0 : i32
    %c0_i32_1 = arith.constant 0 : i32
    return %c0_i32, %c0_i32_0 : i32, i32
  }
  func.func @transform_2(%arg0: i32) -> (i32, i32) {
    %c0_i32 = arith.constant 0 : i32
    %c0_i32_0 = arith.constant 0 : i32
    return %arg0, %c0_i32 : i32, i32
  }
  func.func @transform_3(%arg0: i32) -> (i32, i32) {
    %c0_i32 = arith.constant 0 : i32
    %c0_i32_0 = arith.constant 0 : i32
    return %arg0, %c0_i32 : i32, i32
  }
}

module attributes {stable_mosaic.version = 11 : i64} {
  func.func private @main(%arg0: i32) attributes {dimension_semantics = [#tpu.dimension_semantics<core_parallel>], iteration_bounds = array<i64: 2>, tpu.core_type = #tpu.core_type<sc_scalar_subcore>, window_params = []} {
    return
  }
}

module attributes {stable_mosaic.version = 11 : i64} {
  func.func private @main(%arg0: i32) attributes {dimension_semantics = [#tpu.dimension_semantics<core_parallel>], iteration_bounds = array<i64: 2>, tpu.core_type = #tpu.core_type<sc_scalar_subcore>, window_params = []} {
    return
  }
}

module attributes {stable_mosaic.version = 11 : i64} {
  func.func @_interp_kernel_safe(%arg0: i32, %arg1: memref<32x16xf32, #tpu.memory_space<vmem>>, %arg2: memref<16x32xf32, #tpu.memory_space<vmem>>, %arg3: memref<128x16xf32, #tpu.memory_space<vmem>>, %arg4: memref<8x32x32xf32, #tpu.memory_space<vmem>>) attributes {dimension_semantics = [#tpu.dimension_semantics<parallel>], iteration_bounds = array<i64: 1>, scalar_prefetch = 0 : i64, scratch_operands = 0 : i64, tpu.core_type = #tpu.core_type<tc>, window_params = [{pipeline_mode = #tpu.pipeline_mode<synchronous>, transform_indices = @transform_0, window_bounds = array<i64: 32, 16>}, {pipeline_mode = #tpu.pipeline_mode<synchronous>, transform_indices = @transform_1, window_bounds = array<i64: 16, 32>}, {transform_indices = @transform_2, window_bounds = array<i64: 128, 16>}, {transform_indices = @transform_3, window_bounds = array<i64: 8, 32, 32>}]} {
    %c0 = arith.constant 0 : index
    %c0_0 = arith.constant 0 : index
    %0 = vector.load %arg3[%c0, %c0_0] : memref<128x16xf32, #tpu.memory_space<vmem>>, vector<128x16xf32>
    %c0_1 = arith.constant 0 : index
    %c0_2 = arith.constant 0 : index
    %1 = vector.load %arg2[%c0_1, %c0_2] : memref<16x32xf32, #tpu.memory_space<vmem>>, vector<16x32xf32>
    %cst = arith.constant dense<0.000000e+00> : vector<128x32xf32>
    %2 = tpu.matmul %0, %1, %cst {dimension_numbers = #tpu.dot_dimension_numbers<[1], [0], [0], [1], [0, 0, 1, 1], [], []>} : vector<128x16xf32>, vector<16x32xf32>, vector<128x32xf32> -> vector<128x32xf32>
    %c0_3 = arith.constant 0 : index
    %c0_4 = arith.constant 0 : index
    %3 = vector.load %arg1[%c0_3, %c0_4] : memref<32x16xf32, #tpu.memory_space<vmem>>, vector<32x16xf32>
    %4 = vector.extract_strided_slice %2 {offsets = [0, 0], sizes = [16, 32], strides = [1, 1]} : vector<128x32xf32> to vector<16x32xf32>
    %cst_5 = arith.constant dense<0.000000e+00> : vector<32x32xf32>
    %5 = tpu.matmul %3, %4, %cst_5 {dimension_numbers = #tpu.dot_dimension_numbers<[1], [0], [0], [1], [0, 0, 1, 1], [], []>} : vector<32x16xf32>, vector<16x32xf32>, vector<32x32xf32> -> vector<32x32xf32>
    %c0_6 = arith.constant 0 : index
    %c0_7 = arith.constant 0 : index
    %c0_8 = arith.constant 0 : index
    %6 = vector.load %arg4[%c0_6, %c0_7, %c0_8] : memref<8x32x32xf32, #tpu.memory_space<vmem>>, vector<1x32x32xf32>
    %7 = vector.shape_cast %6 : vector<1x32x32xf32> to vector<32x32xf32>
    %8 = vector.shape_cast %5 : vector<32x32xf32> to vector<1x32x32xf32>
    tpu.vector_store %arg4[%c0_6, %c0_7, %c0_8], %8 {strides = array<i32>} : memref<8x32x32xf32, #tpu.memory_space<vmem>>, vector<1x32x32xf32>,
    %9 = vector.extract_strided_slice %2 {offsets = [16, 0], sizes = [16, 32], strides = [1, 1]} : vector<128x32xf32> to vector<16x32xf32>
    %cst_9 = arith.constant dense<0.000000e+00> : vector<32x32xf32>
    %10 = tpu.matmul %3, %9, %cst_9 {dimension_numbers = #tpu.dot_dimension_numbers<[1], [0], [0], [1], [0, 0, 1, 1], [], []>} : vector<32x16xf32>, vector<16x32xf32>, vector<32x32xf32> -> vector<32x32xf32>
    %c1 = arith.constant 1 : index
    %c0_10 = arith.constant 0 : index
    %c0_11 = arith.constant 0 : index
    %11 = vector.load %arg4[%c1, %c0_10, %c0_11] : memref<8x32x32xf32, #tpu.memory_space<vmem>>, vector<1x32x32xf32>
    %12 = vector.shape_cast %11 : vector<1x32x32xf32> to vector<32x32xf32>
    %13 = vector.shape_cast %10 : vector<32x32xf32> to vector<1x32x32xf32>
    tpu.vector_store %arg4[%c1, %c0_10, %c0_11], %13 {strides = array<i32>} : memref<8x32x32xf32, #tpu.memory_space<vmem>>, vector<1x32x32xf32>,
    %14 = vector.extract_strided_slice %2 {offsets = [32, 0], sizes = [16, 32], strides = [1, 1]} : vector<128x32xf32> to vector<16x32xf32>
    %cst_12 = arith.constant dense<0.000000e+00> : vector<32x32xf32>
    %15 = tpu.matmul %3, %14, %cst_12 {dimension_numbers = #tpu.dot_dimension_numbers<[1], [0], [0], [1], [0, 0, 1, 1], [], []>} : vector<32x16xf32>, vector<16x32xf32>, vector<32x32xf32> -> vector<32x32xf32>
    %c2 = arith.constant 2 : index
    %c0_13 = arith.constant 0 : index
    %c0_14 = arith.constant 0 : index
    %16 = vector.load %arg4[%c2, %c0_13, %c0_14] : memref<8x32x32xf32, #tpu.memory_space<vmem>>, vector<1x32x32xf32>
    %17 = vector.shape_cast %16 : vector<1x32x32xf32> to vector<32x32xf32>
    %18 = vector.shape_cast %15 : vector<32x32xf32> to vector<1x32x32xf32>
    tpu.vector_store %arg4[%c2, %c0_13, %c0_14], %18 {strides = array<i32>} : memref<8x32x32xf32, #tpu.memory_space<vmem>>, vector<1x32x32xf32>,
    %19 = vector.extract_strided_slice %2 {offsets = [48, 0], sizes = [16, 32], strides = [1, 1]} : vector<128x32xf32> to vector<16x32xf32>
    %cst_15 = arith.constant dense<0.000000e+00> : vector<32x32xf32>
    %20 = tpu.matmul %3, %19, %cst_15 {dimension_numbers = #tpu.dot_dimension_numbers<[1], [0], [0], [1], [0, 0, 1, 1], [], []>} : vector<32x16xf32>, vector<16x32xf32>, vector<32x32xf32> -> vector<32x32xf32>
    %c3 = arith.constant 3 : index
    %c0_16 = arith.constant 0 : index
    %c0_17 = arith.constant 0 : index
    %21 = vector.load %arg4[%c3, %c0_16, %c0_17] : memref<8x32x32xf32, #tpu.memory_space<vmem>>, vector<1x32x32xf32>
    %22 = vector.shape_cast %21 : vector<1x32x32xf32> to vector<32x32xf32>
    %23 = vector.shape_cast %20 : vector<32x32xf32> to vector<1x32x32xf32>
    tpu.vector_store %arg4[%c3, %c0_16, %c0_17], %23 {strides = array<i32>} : memref<8x32x32xf32, #tpu.memory_space<vmem>>, vector<1x32x32xf32>,
    %24 = vector.extract_strided_slice %2 {offsets = [64, 0], sizes = [16, 32], strides = [1, 1]} : vector<128x32xf32> to vector<16x32xf32>
    %cst_18 = arith.constant dense<0.000000e+00> : vector<32x32xf32>
    %25 = tpu.matmul %3, %24, %cst_18 {dimension_numbers = #tpu.dot_dimension_numbers<[1], [0], [0], [1], [0, 0, 1, 1], [], []>} : vector<32x16xf32>, vector<16x32xf32>, vector<32x32xf32> -> vector<32x32xf32>
    %c4 = arith.constant 4 : index
    %c0_19 = arith.constant 0 : index
    %c0_20 = arith.constant 0 : index
    %26 = vector.load %arg4[%c4, %c0_19, %c0_20] : memref<8x32x32xf32, #tpu.memory_space<vmem>>, vector<1x32x32xf32>
    %27 = vector.shape_cast %26 : vector<1x32x32xf32> to vector<32x32xf32>
    %28 = vector.shape_cast %25 : vector<32x32xf32> to vector<1x32x32xf32>
    tpu.vector_store %arg4[%c4, %c0_19, %c0_20], %28 {strides = array<i32>} : memref<8x32x32xf32, #tpu.memory_space<vmem>>, vector<1x32x32xf32>,
    %29 = vector.extract_strided_slice %2 {offsets = [80, 0], sizes = [16, 32], strides = [1, 1]} : vector<128x32xf32> to vector<16x32xf32>
    %cst_21 = arith.constant dense<0.000000e+00> : vector<32x32xf32>
    %30 = tpu.matmul %3, %29, %cst_21 {dimension_numbers = #tpu.dot_dimension_numbers<[1], [0], [0], [1], [0, 0, 1, 1], [], []>} : vector<32x16xf32>, vector<16x32xf32>, vector<32x32xf32> -> vector<32x32xf32>
    %c5 = arith.constant 5 : index
    %c0_22 = arith.constant 0 : index
    %c0_23 = arith.constant 0 : index
    %31 = vector.load %arg4[%c5, %c0_22, %c0_23] : memref<8x32x32xf32, #tpu.memory_space<vmem>>, vector<1x32x32xf32>
    %32 = vector.shape_cast %31 : vector<1x32x32xf32> to vector<32x32xf32>
    %33 = vector.shape_cast %30 : vector<32x32xf32> to vector<1x32x32xf32>
    tpu.vector_store %arg4[%c5, %c0_22, %c0_23], %33 {strides = array<i32>} : memref<8x32x32xf32, #tpu.memory_space<vmem>>, vector<1x32x32xf32>,
    %34 = vector.extract_strided_slice %2 {offsets = [96, 0], sizes = [16, 32], strides = [1, 1]} : vector<128x32xf32> to vector<16x32xf32>
    %cst_24 = arith.constant dense<0.000000e+00> : vector<32x32xf32>
    %35 = tpu.matmul %3, %34, %cst_24 {dimension_numbers = #tpu.dot_dimension_numbers<[1], [0], [0], [1], [0, 0, 1, 1], [], []>} : vector<32x16xf32>, vector<16x32xf32>, vector<32x32xf32> -> vector<32x32xf32>
    %c6 = arith.constant 6 : index
    %c0_25 = arith.constant 0 : index
    %c0_26 = arith.constant 0 : index
    %36 = vector.load %arg4[%c6, %c0_25, %c0_26] : memref<8x32x32xf32, #tpu.memory_space<vmem>>, vector<1x32x32xf32>
    %37 = vector.shape_cast %36 : vector<1x32x32xf32> to vector<32x32xf32>
    %38 = vector.shape_cast %35 : vector<32x32xf32> to vector<1x32x32xf32>
    tpu.vector_store %arg4[%c6, %c0_25, %c0_26], %38 {strides = array<i32>} : memref<8x32x32xf32, #tpu.memory_space<vmem>>, vector<1x32x32xf32>,
    %39 = vector.extract_strided_slice %2 {offsets = [112, 0], sizes = [16, 32], strides = [1, 1]} : vector<128x32xf32> to vector<16x32xf32>
    %cst_27 = arith.constant dense<0.000000e+00> : vector<32x32xf32>
    %40 = tpu.matmul %3, %39, %cst_27 {dimension_numbers = #tpu.dot_dimension_numbers<[1], [0], [0], [1], [0, 0, 1, 1], [], []>} : vector<32x16xf32>, vector<16x32xf32>, vector<32x32xf32> -> vector<32x32xf32>
    %c7 = arith.constant 7 : index
    %c0_28 = arith.constant 0 : index
    %c0_29 = arith.constant 0 : index
    %41 = vector.load %arg4[%c7, %c0_28, %c0_29] : memref<8x32x32xf32, #tpu.memory_space<vmem>>, vector<1x32x32xf32>
    %42 = vector.shape_cast %41 : vector<1x32x32xf32> to vector<32x32xf32>
    %43 = vector.shape_cast %40 : vector<32x32xf32> to vector<1x32x32xf32>
    tpu.vector_store %arg4[%c7, %c0_28, %c0_29], %43 {strides = array<i32>} : memref<8x32x32xf32, #tpu.memory_space<vmem>>, vector<1x32x32xf32>,
    return
  }
  func.func @transform_0(%arg0: i32) -> (i32, i32) {
    %c0_i32 = arith.constant 0 : i32
    %c0_i32_0 = arith.constant 0 : i32
    %c0_i32_1 = arith.constant 0 : i32
    return %c0_i32, %c0_i32_0 : i32, i32
  }
  func.func @transform_1(%arg0: i32) -> (i32, i32) {
    %c0_i32 = arith.constant 0 : i32
    %c0_i32_0 = arith.constant 0 : i32
    %c0_i32_1 = arith.constant 0 : i32
    return %c0_i32, %c0_i32_0 : i32, i32
  }
  func.func @transform_2(%arg0: i32) -> (i32, i32) {
    %c0_i32 = arith.constant 0 : i32
    %c0_i32_0 = arith.constant 0 : i32
    return %arg0, %c0_i32 : i32, i32
  }
  func.func @transform_3(%arg0: i32) -> (i32, i32, i32) {
    %c0_i32 = arith.constant 0 : i32
    %c0_i32_0 = arith.constant 0 : i32
    %c0_i32_1 = arith.constant 0 : i32
    return %arg0, %c0_i32, %c0_i32_0 : i32, i32, i32
  }
}

</mosaic_0001>

<llo_original>
// kernel: _interpolate_opt.1
$region0: #{_interpolate_opt.1}
  #allocation0 [shape = 'u32[]', space=smem, size = 0x4, offset = 0x4, fixed_abs, tag = 'smem constant byte address 0x4 - core index']
  #allocation1 [shape = 'u32[144,128]{1,0:T(1,128)}', space=vmem, size = 0x12000, scoped, tag = 'internal scratch']
  %s0 = inlined_call_operand.hbm [shape: f32[16,32], index: 0, kind: input, shape index: {}, may-alias: {0,1}]
  %s1 = inlined_call_operand.hbm [shape: f32[16,32], index: 1, kind: input, shape index: {}, may-alias: {0,1}]
  %s2 = inlined_call_operand.vmem [shape: f32[128,16], index: 2, kind: input, shape index: {}]
  %s3 = inlined_call_operand.vmem [shape: f32[8,1024], index: 3, kind: output, shape index: {}]
  %s4 = sld [smem:[#allocation0]]
  $region30: #{_interpolate_opt.1} parent=0
    _
  %s6 = ssub.s32 1, %s4
  %s7 = scalar_select 0, %s6, %s4
  $region1: #{_interpolate_opt.1} parent=0
    #allocation2 [shape = 'u8[8192]{0}', space=vmem, size = 0x2000, scoped, tag = 'input window, operand 0, single buffered']
    #allocation3 [shape = 's32[1]{0}', space=sflag, size = 0x4, scoped, tag = 'scoped memory for _interpolate_opt.1']
    #allocation4 [shape = 'u8[8192]{0}', space=vmem, size = 0x2000, scoped, tag = 'input window, operand 1, single buffered']
    #allocation5 [shape = 's32[1]{0}', space=sflag, size = 0x4, scoped, tag = 'scoped memory for _interpolate_opt.1']
    %8 = vsyncpa [#allocation3], 0
    %9 = vsyncpa [#allocation5], 0
    // Predicated region
    $region2: #{_interpolate_opt.1} parent=1 // pred_check
      _
    $region3: #{_interpolate_opt.1} parent=1 // pred_check_branch
      %11 = sbr.rel (0) target = $region5
    $region4: #{_interpolate_opt.1} parent=1 // pred_region
      %s13 = ssub.s32 256, 256
      %14 = vsyncadd [#allocation3], %s13
      %s15 = sshll.u32 [#allocation2], 4
      %s16 = int_to_ptr.vmem [resolvable:$true] %s15
      %21 = dma.hbm_to_vmem [thread:$0]  %s0, 256, %s16, [#allocation3], 128, 128, 8
    $region5: #{_interpolate_opt.1} parent=1 // pred_fallthru
      _
    // Predicated region
    $region6: #{_interpolate_opt.1} parent=1 // pred_check
      _
    $region7: #{_interpolate_opt.1} parent=1 // pred_check_branch
      %23 = sbr.rel (0) target = $region9
    $region8: #{_interpolate_opt.1} parent=1 // pred_region
      %s25 = ssub.s32 256, 256
      %26 = vsyncadd [#allocation5], %s25
      %s27 = sshll.u32 [#allocation4], 4
      %s28 = int_to_ptr.vmem [resolvable:$true] %s27
      %33 = dma.hbm_to_vmem [thread:$0]  %s1, 256, %s28, [#allocation5], 128, 128, 8
    $region9: #{_interpolate_opt.1} parent=1 // pred_fallthru
      _
    // Predicated region
    $region10: #{_interpolate_opt.1} parent=1 // pred_check
      _
    $region11: #{_interpolate_opt.1} parent=1 // pred_check_branch
      %35 = sbr.rel (0) target = $region13
    $region12: #{_interpolate_opt.1} parent=1 // pred_region
      _
    $region13: #{_interpolate_opt.1} parent=1 // pred_fallthru
      _
    // Predicated region
    $region14: #{_interpolate_opt.1} parent=1 // pred_check
      _
    $region15: #{_interpolate_opt.1} parent=1 // pred_check_branch
      %37 = sbr.rel (0) target = $region17
    $region16: #{_interpolate_opt.1} parent=1 // pred_region
      %38 = dma.done [#allocation3], 256
    $region17: #{_interpolate_opt.1} parent=1 // pred_fallthru
      _
    // Predicated region
    $region18: #{_interpolate_opt.1} parent=1 // pred_check
      _
    $region19: #{_interpolate_opt.1} parent=1 // pred_check_branch
      %40 = sbr.rel (0) target = $region21
    $region20: #{_interpolate_opt.1} parent=1 // pred_region
      %41 = dma.done [#allocation5], 256
    $region21: #{_interpolate_opt.1} parent=1 // pred_fallthru
      _
    %v42 = vld [vmem:[%s2] sm:$0xff]
    %v43 = vld [vmem:[%s2 + $0x8] sm:$0xff]
    %v44 = vld [vmem:[%s2 + $0x10] sm:$0xff]
    %v45 = vld [vmem:[%s2 + $0x18] sm:$0xff]
    %v46 = vld [vmem:[%s2 + $0x20] sm:$0xff]
    %v47 = vld [vmem:[%s2 + $0x28] sm:$0xff]
    %v48 = vld [vmem:[%s2 + $0x30] sm:$0xff]
    %v49 = vld [vmem:[%s2 + $0x38] sm:$0xff]
    %v50 = vld [vmem:[%s2 + $0x40] sm:$0xff]
    %v51 = vld [vmem:[%s2 + $0x48] sm:$0xff]
    %v52 = vld [vmem:[%s2 + $0x50] sm:$0xff]
    %v53 = vld [vmem:[%s2 + $0x58] sm:$0xff]
    %v54 = vld [vmem:[%s2 + $0x60] sm:$0xff]
    %v55 = vld [vmem:[%s2 + $0x68] sm:$0xff]
    %v56 = vld [vmem:[%s2 + $0x70] sm:$0xff]
    %v57 = vld [vmem:[%s2 + $0x78] sm:$0xff]
    %v58 = vld [vmem:[#allocation4] sm:$0xff]
    %v59 = vld [vmem:[#allocation4 + $0x8] sm:$0xff]
    %vm60 = vcmask 130048
    %v62 = vsel %vm60, %v42, 0
    %v65 = vsel %vm60, %v43, 0
    %v68 = vsel %vm60, %v44, 0
    %v71 = vsel %vm60, %v45, 0
    %v74 = vsel %vm60, %v46, 0
    %v77 = vsel %vm60, %v47, 0
    %v80 = vsel %vm60, %v48, 0
    %v83 = vsel %vm60, %v49, 0
    %v86 = vsel %vm60, %v50, 0
    %v89 = vsel %vm60, %v51, 0
    %v92 = vsel %vm60, %v52, 0
    %v95 = vsel %vm60, %v53, 0
    %v98 = vsel %vm60, %v54, 0
    %v101 = vsel %vm60, %v55, 0
    %v104 = vsel %vm60, %v56, 0
    %v107 = vsel %vm60, %v57, 0
    %109 = vmatprep.subr.mxu0 0.0
    %110 = vmatpush1.msra.mxu0 %v58
    %111 = vmatprep.subr.mxu0 0.0
    %112 = vmatpush1.msra.mxu0 %v59
    %113 = vmatprep.subr.mxu0 0.0
    %114 = vmatpush1.msra.mxu0 0.0
    %115 = vmatprep.subr.mxu0 0.0
    %116 = vmatpush1.msra.mxu0 0.0
    %117 = vmatprep.subr.mxu0 0.0
    %118 = vmatpush1.msra.mxu0 0.0
    %119 = vmatprep.subr.mxu0 0.0
    %120 = vmatpush1.msra.mxu0 0.0
    %121 = vmatprep.subr.mxu0 0.0
    %122 = vmatpush1.msra.mxu0 0.0
    %123 = vmatprep.subr.mxu0 0.0
    %124 = vmatpush1.msra.mxu0 0.0
    %125 = vmatprep.subr.mxu0 0.0
    %126 = vmatpush1.msra.mxu0 0.0
    %127 = vmatprep.subr.mxu0 0.0
    %128 = vmatpush1.msra.mxu0 0.0
    %129 = vmatprep.subr.mxu0 0.0
    %130 = vmatpush1.msra.mxu0 0.0
    %131 = vmatprep.subr.mxu0 0.0
    %132 = vmatpush1.msra.mxu0 0.0
    %133 = vmatprep.subr.mxu0 0.0
    %134 = vmatpush1.msra.mxu0 0.0
    %135 = vmatprep.subr.mxu0 0.0
    %136 = vmatpush1.msra.mxu0 0.0
    %137 = vmatprep.subr.mxu0 0.0
    %138 = vmatpush1.msra.mxu0 0.0
    %139 = vmatprep.subr.mxu0 0.0
    %140 = vmatpush1.msra.mxu0 0.0
    %141 = vmatprep.subr.mxu0 0.0
    %142 = vmatpush1.msra.mxu0 0.0
    %143 = vmatprep.subr.mxu0 0.0
    %144 = vmatpush1.msra.mxu0 0.0
    %145 = vmatprep.subr.mxu0 0.0
    %146 = vmatpush1.msra.mxu0 0.0
    %147 = vmatprep.subr.mxu0 0.0
    %148 = vmatpush1.msra.mxu0 0.0
    %149 = vmatprep.subr.mxu0 0.0
    %150 = vmatpush1.msra.mxu0 0.0
    %151 = vmatprep.subr.mxu0 0.0
    %152 = vmatpush1.msra.mxu0 0.0
    %153 = vmatprep.subr.mxu0 0.0
    %154 = vmatpush1.msra.mxu0 0.0
    %155 = vmatprep.subr.mxu0 0.0
    %156 = vmatpush1.msra.mxu0 0.0
    %157 = vmatprep.subr.mxu0 0.0
    %158 = vmatpush1.msra.mxu0 0.0
    %159 = vmatprep.subr.mxu0 0.0
    %160 = vmatpush1.msra.mxu0 0.0
    %161 = vmatprep.subr.mxu0 0.0
    %162 = vmatpush1.msra.mxu0 0.0
    %163 = vmatprep.subr.mxu0 0.0
    %164 = vmatpush1.msra.mxu0 0.0
    %165 = vmatprep.subr.mxu0 0.0
    %166 = vmatpush1.msra.mxu0 0.0
    %167 = vmatprep.subr.mxu0 0.0
    %168 = vmatpush1.msra.mxu0 0.0
    %169 = vmatprep.subr.mxu0 0.0
    %170 = vmatpush1.msra.mxu0 0.0
    %171 = vmatprep.subr.mxu0 0.0
    %172 = vmatpush1.msra.mxu0 0.0
    %173 = vmatprep.mubr.f32.mxu0 0.0
    %174 = vmatmul.mubr.f32.gmra.mrb[0].mxu0 %v62
    %v175 = vpop.f32.mrb[0].mxu0
    %v176 = vadd.f32 0.0, %v175
    %v177 = vpop.f32.mrb[0].mxu0
    %178 = vmatprep.mubr.f32.mxu0 0.0
    %179 = vmatmul.mubr.f32.gmra.mrb[0].mxu0 %v65
    %v180 = vpop.f32.mrb[0].mxu0
    %v181 = vadd.f32 0.0, %v180
    %v182 = vpop.f32.mrb[0].mxu0
    %183 = vmatprep.mubr.f32.mxu0 0.0
    %184 = vmatmul.mubr.f32.gmra.mrb[0].mxu0 %v68
    %v185 = vpop.f32.mrb[0].mxu0
    %v186 = vadd.f32 0.0, %v185
    %v187 = vpop.f32.mrb[0].mxu0
    %188 = vmatprep.mubr.f32.mxu0 0.0
    %189 = vmatmul.mubr.f32.gmra.mrb[0].mxu0 %v71
    %v190 = vpop.f32.mrb[0].mxu0
    %v191 = vadd.f32 0.0, %v190
    %v192 = vpop.f32.mrb[0].mxu0
    %193 = vmatprep.mubr.f32.mxu0 0.0
    %194 = vmatmul.mubr.f32.gmra.mrb[0].mxu0 %v74
    %v195 = vpop.f32.mrb[0].mxu0
    %v196 = vadd.f32 0.0, %v195
    %v197 = vpop.f32.mrb[0].mxu0
    %198 = vmatprep.mubr.f32.mxu0 0.0
    %199 = vmatmul.mubr.f32.gmra.mrb[0].mxu0 %v77
    %v200 = vpop.f32.mrb[0].mxu0
    %v201 = vadd.f32 0.0, %v200
    %v202 = vpop.f32.mrb[0].mxu0
    %203 = vmatprep.mubr.f32.mxu0 0.0
    %204 = vmatmul.mubr.f32.gmra.mrb[0].mxu0 %v80
    %v205 = vpop.f32.mrb[0].mxu0
    %v206 = vadd.f32 0.0, %v205
    %v207 = vpop.f32.mrb[0].mxu0
    %208 = vmatprep.mubr.f32.mxu0 0.0
    %209 = vmatmul.mubr.f32.gmra.mrb[0].mxu0 %v83
    %v210 = vpop.f32.mrb[0].mxu0
    %v211 = vadd.f32 0.0, %v210
    %v212 = vpop.f32.mrb[0].mxu0
    %213 = vmatprep.mubr.f32.mxu0 0.0
    %214 = vmatmul.mubr.f32.gmra.mrb[0].mxu0 %v86
    %v215 = vpop.f32.mrb[0].mxu0
    %v216 = vadd.f32 0.0, %v215
    %v217 = vpop.f32.mrb[0].mxu0
    %218 = vmatprep.mubr.f32.mxu0 0.0
    %219 = vmatmul.mubr.f32.gmra.mrb[0].mxu0 %v89
    %v220 = vpop.f32.mrb[0].mxu0
    %v221 = vadd.f32 0.0, %v220
    %v222 = vpop.f32.mrb[0].mxu0
    %223 = vmatprep.mubr.f32.mxu0 0.0
    %224 = vmatmul.mubr.f32.gmra.mrb[0].mxu0 %v92
    %v225 = vpop.f32.mrb[0].mxu0
    %v226 = vadd.f32 0.0, %v225
    %v227 = vpop.f32.mrb[0].mxu0
    %228 = vmatprep.mubr.f32.mxu0 0.0
    %229 = vmatmul.mubr.f32.gmra.mrb[0].mxu0 %v95
    %v230 = vpop.f32.mrb[0].mxu0
    %v231 = vadd.f32 0.0, %v230
    %v232 = vpop.f32.mrb[0].mxu0
    %233 = vmatprep.mubr.f32.mxu0 0.0
    %234 = vmatmul.mubr.f32.gmra.mrb[0].mxu0 %v98
    %v235 = vpop.f32.mrb[0].mxu0
    %v236 = vadd.f32 0.0, %v235
    %v237 = vpop.f32.mrb[0].mxu0
    %238 = vmatprep.mubr.f32.mxu0 0.0
    %239 = vmatmul.mubr.f32.gmra.mrb[0].mxu0 %v101
    %v240 = vpop.f32.mrb[0].mxu0
    %v241 = vadd.f32 0.0, %v240
    %v242 = vpop.f32.mrb[0].mxu0
    %243 = vmatprep.mubr.f32.mxu0 0.0
    %244 = vmatmul.mubr.f32.gmra.mrb[0].mxu0 %v104
    %v245 = vpop.f32.mrb[0].mxu0
    %v246 = vadd.f32 0.0, %v245
    %v247 = vpop.f32.mrb[0].mxu0
    %248 = vmatprep.mubr.f32.mxu0 0.0
    %249 = vmatmul.mubr.f32.gmra.mrb[0].mxu0 %v107
    %v250 = vpop.f32.mrb[0].mxu0
    %v251 = vadd.f32 0.0, %v250
    %v252 = vpop.f32.mrb[0].mxu0
    %253 = vdwg.mxu0
    %254 = vxpose.xlu0.b32.start [1/16] %v176, 128
    %255 = vxpose.xlu0.b32.cont [2/16] %v181, 128
    %256 = vxpose.xlu0.b32.cont [3/16] 0.0, 128
    %257 = vxpose.xlu0.b32.cont [4/16] 0.0, 128
    %258 = vxpose.xlu0.b32.cont [5/16] 0.0, 128
    %259 = vxpose.xlu0.b32.cont [6/16] 0.0, 128
    %260 = vxpose.xlu0.b32.cont [7/16] 0.0, 128
    %261 = vxpose.xlu0.b32.cont [8/16] 0.0, 128
    %262 = vxpose.xlu0.b32.cont [9/16] 0.0, 128
    %263 = vxpose.xlu0.b32.cont [10/16] 0.0, 128
    %264 = vxpose.xlu0.b32.cont [11/16] 0.0, 128
    %265 = vxpose.xlu0.b32.cont [12/16] 0.0, 128
    %266 = vxpose.xlu0.b32.cont [13/16] 0.0, 128
    %267 = vxpose.xlu0.b32.cont [14/16] 0.0, 128
    %268 = vxpose.xlu0.b32.cont [15/16] 0.0, 128
    %269 = vxpose.xlu0.b32.end [16/16] 0.0, 128
    %v270 = vpop.trf.xlu0
    %v271 = vpop.trf.xlu0
    %v272 = vpop.trf.xlu0
    %v273 = vpop.trf.xlu0
    %v274 = vpop.trf.xlu0
    %v275 = vpop.trf.xlu0
    %v276 = vpop.trf.xlu0
    %v277 = vpop.trf.xlu0
    %v278 = vpop.trf.xlu0
    %v279 = vpop.trf.xlu0
    %v280 = vpop.trf.xlu0
    %v281 = vpop.trf.xlu0
    %v282 = vpop.trf.xlu0
    %v283 = vpop.trf.xlu0
    %v284 = vpop.trf.xlu0
    %v285 = vpop.trf.xlu0
    %286 = vxpose.xlu0.b32.start [1/16] %v186, 128
    %287 = vxpose.xlu0.b32.cont [2/16] %v191, 128
    %288 = vxpose.xlu0.b32.cont [3/16] 0.0, 128
    %289 = vxpose.xlu0.b32.cont [4/16] 0.0, 128
    %290 = vxpose.xlu0.b32.cont [5/16] 0.0, 128
    %291 = vxpose.xlu0.b32.cont [6/16] 0.0, 128
    %292 = vxpose.xlu0.b32.cont [7/16] 0.0, 128
    %293 = vxpose.xlu0.b32.cont [8/16] 0.0, 128
    %294 = vxpose.xlu0.b32.cont [9/16] 0.0, 128
    %295 = vxpose.xlu0.b32.cont [10/16] 0.0, 128
    %296 = vxpose.xlu0.b32.cont [11/16] 0.0, 128
    %297 = vxpose.xlu0.b32.cont [12/16] 0.0, 128
    %298 = vxpose.xlu0.b32.cont [13/16] 0.0, 128
    %299 = vxpose.xlu0.b32.cont [14/16] 0.0, 128
    %300 = vxpose.xlu0.b32.cont [15/16] 0.0, 128
    %301 = vxpose.xlu0.b32.end [16/16] 0.0, 128
    %v302 = vpop.trf.xlu0
    %v303 = vpop.trf.xlu0
    %v304 = vpop.trf.xlu0
    %v305 = vpop.trf.xlu0
    %v306 = vpop.trf.xlu0
    %v307 = vpop.trf.xlu0
    %v308 = vpop.trf.xlu0
    %v309 = vpop.trf.xlu0
    %v310 = vpop.trf.xlu0
    %v311 = vpop.trf.xlu0
    %v312 = vpop.trf.xlu0
    %v313 = vpop.trf.xlu0
    %v314 = vpop.trf.xlu0
    %v315 = vpop.trf.xlu0
    %v316 = vpop.trf.xlu0
    %v317 = vpop.trf.xlu0
    %318 = vxpose.xlu0.b32.start [1/16] %v196, 128
    %319 = vxpose.xlu0.b32.cont [2/16] %v201, 128
    %320 = vxpose.xlu0.b32.cont [3/16] 0.0, 128
    %321 = vxpose.xlu0.b32.cont [4/16] 0.0, 128
    %322 = vxpose.xlu0.b32.cont [5/16] 0.0, 128
    %323 = vxpose.xlu0.b32.cont [6/16] 0.0, 128
    %324 = vxpose.xlu0.b32.cont [7/16] 0.0, 128
    %325 = vxpose.xlu0.b32.cont [8/16] 0.0, 128
    %326 = vxpose.xlu0.b32.cont [9/16] 0.0, 128
    %327 = vxpose.xlu0.b32.cont [10/16] 0.0, 128
    %328 = vxpose.xlu0.b32.cont [11/16] 0.0, 128
    %329 = vxpose.xlu0.b32.cont [12/16] 0.0, 128
    %330 = vxpose.xlu0.b32.cont [13/16] 0.0, 128
    %331 = vxpose.xlu0.b32.cont [14/16] 0.0, 128
    %332 = vxpose.xlu0.b32.cont [15/16] 0.0, 128
    %333 = vxpose.xlu0.b32.end [16/16] 0.0, 128
    %v334 = vpop.trf.xlu0
    %v335 = vpop.trf.xlu0
    %v336 = vpop.trf.xlu0
    %v337 = vpop.trf.xlu0
    %v338 = vpop.trf.xlu0
    %v339 = vpop.trf.xlu0
    %v340 = vpop.trf.xlu0
    %v341 = vpop.trf.xlu0
    %v342 = vpop.trf.xlu0
    %v343 = vpop.trf.xlu0
    %v344 = vpop.trf.xlu0
    %v345 = vpop.trf.xlu0
    %v346 = vpop.trf.xlu0
    %v347 = vpop.trf.xlu0
    %v348 = vpop.trf.xlu0
    %v349 = vpop.trf.xlu0
    %350 = vxpose.xlu0.b32.start [1/16] %v206, 128
    %351 = vxpose.xlu0.b32.cont [2/16] %v211, 128
    %352 = vxpose.xlu0.b32.cont [3/16] 0.0, 128
    %353 = vxpose.xlu0.b32.cont [4/16] 0.0, 128
    %354 = vxpose.xlu0.b32.cont [5/16] 0.0, 128
    %355 = vxpose.xlu0.b32.cont [6/16] 0.0, 128
    %356 = vxpose.xlu0.b32.cont [7/16] 0.0, 128
    %357 = vxpose.xlu0.b32.cont [8/16] 0.0, 128
    %358 = vxpose.xlu0.b32.cont [9/16] 0.0, 128
    %359 = vxpose.xlu0.b32.cont [10/16] 0.0, 128
    %360 = vxpose.xlu0.b32.cont [11/16] 0.0, 128
    %361 = vxpose.xlu0.b32.cont [12/16] 0.0, 128
    %362 = vxpose.xlu0.b32.cont [13/16] 0.0, 128
    %363 = vxpose.xlu0.b32.cont [14/16] 0.0, 128
    %364 = vxpose.xlu0.b32.cont [15/16] 0.0, 128
    %365 = vxpose.xlu0.b32.end [16/16] 0.0, 128
    %v366 = vpop.trf.xlu0
    %v367 = vpop.trf.xlu0
    %v368 = vpop.trf.xlu0
    %v369 = vpop.trf.xlu0
    %v370 = vpop.trf.xlu0
    %v371 = vpop.trf.xlu0
    %v372 = vpop.trf.xlu0
    %v373 = vpop.trf.xlu0
    %v374 = vpop.trf.xlu0
    %v375 = vpop.trf.xlu0
    %v376 = vpop.trf.xlu0
    %v377 = vpop.trf.xlu0
    %v378 = vpop.trf.xlu0
    %v379 = vpop.trf.xlu0
    %v380 = vpop.trf.xlu0
    %v381 = vpop.trf.xlu0
    %382 = vxpose.xlu0.b32.start [1/16] %v216, 128
    %383 = vxpose.xlu0.b32.cont [2/16] %v221, 128
    %384 = vxpose.xlu0.b32.cont [3/16] 0.0, 128
    %385 = vxpose.xlu0.b32.cont [4/16] 0.0, 128
    %386 = vxpose.xlu0.b32.cont [5/16] 0.0, 128
    %387 = vxpose.xlu0.b32.cont [6/16] 0.0, 128
    %388 = vxpose.xlu0.b32.cont [7/16] 0.0, 128
    %389 = vxpose.xlu0.b32.cont [8/16] 0.0, 128
    %390 = vxpose.xlu0.b32.cont [9/16] 0.0, 128
    %391 = vxpose.xlu0.b32.cont [10/16] 0.0, 128
    %392 = vxpose.xlu0.b32.cont [11/16] 0.0, 128
    %393 = vxpose.xlu0.b32.cont [12/16] 0.0, 128
    %394 = vxpose.xlu0.b32.cont [13/16] 0.0, 128
    %395 = vxpose.xlu0.b32.cont [14/16] 0.0, 128
    %396 = vxpose.xlu0.b32.cont [15/16] 0.0, 128
    %397 = vxpose.xlu0.b32.end [16/16] 0.0, 128
    %v398 = vpop.trf.xlu0
    %v399 = vpop.trf.xlu0
    %v400 = vpop.trf.xlu0
    %v401 = vpop.trf.xlu0
    %v402 = vpop.trf.xlu0
    %v403 = vpop.trf.xlu0
    %v404 = vpop.trf.xlu0
    %v405 = vpop.trf.xlu0
    %v406 = vpop.trf.xlu0
    %v407 = vpop.trf.xlu0
    %v408 = vpop.trf.xlu0
    %v409 = vpop.trf.xlu0
    %v410 = vpop.trf.xlu0
    %v411 = vpop.trf.xlu0
    %v412 = vpop.trf.xlu0
    %v413 = vpop.trf.xlu0
    %414 = vxpose.xlu0.b32.start [1/16] %v226, 128
    %415 = vxpose.xlu0.b32.cont [2/16] %v231, 128
    %416 = vxpose.xlu0.b32.cont [3/16] 0.0, 128
    %417 = vxpose.xlu0.b32.cont [4/16] 0.0, 128
    %418 = vxpose.xlu0.b32.cont [5/16] 0.0, 128
    %419 = vxpose.xlu0.b32.cont [6/16] 0.0, 128
    %420 = vxpose.xlu0.b32.cont [7/16] 0.0, 128
    %421 = vxpose.xlu0.b32.cont [8/16] 0.0, 128
    %422 = vxpose.xlu0.b32.cont [9/16] 0.0, 128
    %423 = vxpose.xlu0.b32.cont [10/16] 0.0, 128
    %424 = vxpose.xlu0.b32.cont [11/16] 0.0, 128
    %425 = vxpose.xlu0.b32.cont [12/16] 0.0, 128
    %426 = vxpose.xlu0.b32.cont [13/16] 0.0, 128
    %427 = vxpose.xlu0.b32.cont [14/16] 0.0, 128
    %428 = vxpose.xlu0.b32.cont [15/16] 0.0, 128
    %429 = vxpose.xlu0.b32.end [16/16] 0.0, 128
    %v430 = vpop.trf.xlu0
    %v431 = vpop.trf.xlu0
    %v432 = vpop.trf.xlu0
    %v433 = vpop.trf.xlu0
    %v434 = vpop.trf.xlu0
    %v435 = vpop.trf.xlu0
    %v436 = vpop.trf.xlu0
    %v437 = vpop.trf.xlu0
    %v438 = vpop.trf.xlu0
    %v439 = vpop.trf.xlu0
    %v440 = vpop.trf.xlu0
    %v441 = vpop.trf.xlu0
    %v442 = vpop.trf.xlu0
    %v443 = vpop.trf.xlu0
    %v444 = vpop.trf.xlu0
    %v445 = vpop.trf.xlu0
    %446 = vxpose.xlu0.b32.start [1/16] %v236, 128
    %447 = vxpose.xlu0.b32.cont [2/16] %v241, 128
    %448 = vxpose.xlu0.b32.cont [3/16] 0.0, 128
    %449 = vxpose.xlu0.b32.cont [4/16] 0.0, 128
    %450 = vxpose.xlu0.b32.cont [5/16] 0.0, 128
    %451 = vxpose.xlu0.b32.cont [6/16] 0.0, 128
    %452 = vxpose.xlu0.b32.cont [7/16] 0.0, 128
    %453 = vxpose.xlu0.b32.cont [8/16] 0.0, 128
    %454 = vxpose.xlu0.b32.cont [9/16] 0.0, 128
    %455 = vxpose.xlu0.b32.cont [10/16] 0.0, 128
    %456 = vxpose.xlu0.b32.cont [11/16] 0.0, 128
    %457 = vxpose.xlu0.b32.cont [12/16] 0.0, 128
    %458 = vxpose.xlu0.b32.cont [13/16] 0.0, 128
    %459 = vxpose.xlu0.b32.cont [14/16] 0.0, 128
    %460 = vxpose.xlu0.b32.cont [15/16] 0.0, 128
    %461 = vxpose.xlu0.b32.end [16/16] 0.0, 128
    %v462 = vpop.trf.xlu0
    %v463 = vpop.trf.xlu0
    %v464 = vpop.trf.xlu0
    %v465 = vpop.trf.xlu0
    %v466 = vpop.trf.xlu0
    %v467 = vpop.trf.xlu0
    %v468 = vpop.trf.xlu0
    %v469 = vpop.trf.xlu0
    %v470 = vpop.trf.xlu0
    %v471 = vpop.trf.xlu0
    %v472 = vpop.trf.xlu0
    %v473 = vpop.trf.xlu0
    %v474 = vpop.trf.xlu0
    %v475 = vpop.trf.xlu0
    %v476 = vpop.trf.xlu0
    %v477 = vpop.trf.xlu0
    %478 = vxpose.xlu0.b32.start [1/16] %v246, 128
    %479 = vxpose.xlu0.b32.cont [2/16] %v251, 128
    %480 = vxpose.xlu0.b32.cont [3/16] 0.0, 128
    %481 = vxpose.xlu0.b32.cont [4/16] 0.0, 128
    %482 = vxpose.xlu0.b32.cont [5/16] 0.0, 128
    %483 = vxpose.xlu0.b32.cont [6/16] 0.0, 128
    %484 = vxpose.xlu0.b32.cont [7/16] 0.0, 128
    %485 = vxpose.xlu0.b32.cont [8/16] 0.0, 128
    %486 = vxpose.xlu0.b32.cont [9/16] 0.0, 128
    %487 = vxpose.xlu0.b32.cont [10/16] 0.0, 128
    %488 = vxpose.xlu0.b32.cont [11/16] 0.0, 128
    %489 = vxpose.xlu0.b32.cont [12/16] 0.0, 128
    %490 = vxpose.xlu0.b32.cont [13/16] 0.0, 128
    %491 = vxpose.xlu0.b32.cont [14/16] 0.0, 128
    %492 = vxpose.xlu0.b32.cont [15/16] 0.0, 128
    %493 = vxpose.xlu0.b32.end [16/16] 0.0, 128
    %v494 = vpop.trf.xlu0
    %v495 = vpop.trf.xlu0
    %v496 = vpop.trf.xlu0
    %v497 = vpop.trf.xlu0
    %v498 = vpop.trf.xlu0
    %v499 = vpop.trf.xlu0
    %v500 = vpop.trf.xlu0
    %v501 = vpop.trf.xlu0
    %v502 = vpop.trf.xlu0
    %v503 = vpop.trf.xlu0
    %v504 = vpop.trf.xlu0
    %v505 = vpop.trf.xlu0
    %v506 = vpop.trf.xlu0
    %v507 = vpop.trf.xlu0
    %v508 = vpop.trf.xlu0
    %v509 = vpop.trf.xlu0
    %v510 = vld [vmem:[#allocation2] sm:$0xff]
    %v511 = vld [vmem:[#allocation2 + $0x8] sm:$0xff]
    %v513 = vsel %vm60, %v270, 0
    %v516 = vsel %vm60, %v271, 0
    %v519 = vsel %vm60, %v272, 0
    %v522 = vsel %vm60, %v273, 0
    %v525 = vsel %vm60, %v302, 0
    %v528 = vsel %vm60, %v303, 0
    %v531 = vsel %vm60, %v304, 0
    %v534 = vsel %vm60, %v305, 0
    %v537 = vsel %vm60, %v334, 0
    %v540 = vsel %vm60, %v335, 0
    %v543 = vsel %vm60, %v336, 0
    %v546 = vsel %vm60, %v337, 0
    %v549 = vsel %vm60, %v366, 0
    %v552 = vsel %vm60, %v367, 0
    %v555 = vsel %vm60, %v368, 0
    %v558 = vsel %vm60, %v369, 0
    %v561 = vsel %vm60, %v398, 0
    %v564 = vsel %vm60, %v399, 0
    %v567 = vsel %vm60, %v400, 0
    %v570 = vsel %vm60, %v401, 0
    %v573 = vsel %vm60, %v430, 0
    %v576 = vsel %vm60, %v431, 0
    %v579 = vsel %vm60, %v432, 0
    %v582 = vsel %vm60, %v433, 0
    %v585 = vsel %vm60, %v462, 0
    %v588 = vsel %vm60, %v463, 0
    %v591 = vsel %vm60, %v464, 0
    %v594 = vsel %vm60, %v465, 0
    %v597 = vsel %vm60, %v494, 0
    %v600 = vsel %vm60, %v495, 0
    %v603 = vsel %vm60, %v496, 0
    %v606 = vsel %vm60, %v497, 0
    %608 = vmatprep.subr.mxu0 0.0
    %609 = vmatpush1.msra.mxu0 %v510
    %610 = vmatprep.subr.mxu0 0.0
    %611 = vmatpush1.msra.mxu0 %v511
    %612 = vmatprep.subr.mxu0 0.0
    %613 = vmatpush1.msra.mxu0 0.0
    %614 = vmatprep.subr.mxu0 0.0
    %615 = vmatpush1.msra.mxu0 0.0
    %616 = vmatprep.subr.mxu0 0.0
    %617 = vmatpush1.msra.mxu0 0.0
    %618 = vmatprep.subr.mxu0 0.0
    %619 = vmatpush1.msra.mxu0 0.0
    %620 = vmatprep.subr.mxu0 0.0
    %621 = vmatpush1.msra.mxu0 0.0
    %622 = vmatprep.subr.mxu0 0.0
    %623 = vmatpush1.msra.mxu0 0.0
    %624 = vmatprep.subr.mxu0 0.0
    %625 = vmatpush1.msra.mxu0 0.0
    %626 = vmatprep.subr.mxu0 0.0
    %627 = vmatpush1.msra.mxu0 0.0
    %628 = vmatprep.subr.mxu0 0.0
    %629 = vmatpush1.msra.mxu0 0.0
    %630 = vmatprep.subr.mxu0 0.0
    %631 = vmatpush1.msra.mxu0 0.0
    %632 = vmatprep.subr.mxu0 0.0
    %633 = vmatpush1.msra.mxu0 0.0
    %634 = vmatprep.subr.mxu0 0.0
    %635 = vmatpush1.msra.mxu0 0.0
    %636 = vmatprep.subr.mxu0 0.0
    %637 = vmatpush1.msra.mxu0 0.0
    %638 = vmatprep.subr.mxu0 0.0
    %639 = vmatpush1.msra.mxu0 0.0
    %640 = vmatprep.subr.mxu0 0.0
    %641 = vmatpush1.msra.mxu0 0.0
    %642 = vmatprep.subr.mxu0 0.0
    %643 = vmatpush1.msra.mxu0 0.0
    %644 = vmatprep.subr.mxu0 0.0
    %645 = vmatpush1.msra.mxu0 0.0
    %646 = vmatprep.subr.mxu0 0.0
    %647 = vmatpush1.msra.mxu0 0.0
    %648 = vmatprep.subr.mxu0 0.0
    %649 = vmatpush1.msra.mxu0 0.0
    %650 = vmatprep.subr.mxu0 0.0
    %651 = vmatpush1.msra.mxu0 0.0
    %652 = vmatprep.subr.mxu0 0.0
    %653 = vmatpush1.msra.mxu0 0.0
    %654 = vmatprep.subr.mxu0 0.0
    %655 = vmatpush1.msra.mxu0 0.0
    %656 = vmatprep.subr.mxu0 0.0
    %657 = vmatpush1.msra.mxu0 0.0
    %658 = vmatprep.subr.mxu0 0.0
    %659 = vmatpush1.msra.mxu0 0.0
    %660 = vmatprep.subr.mxu0 0.0
    %661 = vmatpush1.msra.mxu0 0.0
    %662 = vmatprep.subr.mxu0 0.0
    %663 = vmatpush1.msra.mxu0 0.0
    %664 = vmatprep.subr.mxu0 0.0
    %665 = vmatpush1.msra.mxu0 0.0
    %666 = vmatprep.subr.mxu0 0.0
    %667 = vmatpush1.msra.mxu0 0.0
    %668 = vmatprep.subr.mxu0 0.0
    %669 = vmatpush1.msra.mxu0 0.0
    %670 = vmatprep.subr.mxu0 0.0
    %671 = vmatpush1.msra.mxu0 0.0
    %672 = vmatprep.mubr.f32.mxu0 0.0
    %673 = vmatmul.mubr.f32.gmra.mrb[0].mxu0 %v513
    %v674 = vpop.f32.mrb[0].mxu0
    %v675 = vadd.f32 0.0, %v674
    %v676 = vpop.f32.mrb[0].mxu0
    %677 = vmatprep.mubr.f32.mxu0 0.0
    %678 = vmatmul.mubr.f32.gmra.mrb[0].mxu0 %v516
    %v679 = vpop.f32.mrb[0].mxu0
    %v680 = vadd.f32 0.0, %v679
    %v681 = vpop.f32.mrb[0].mxu0
    %682 = vmatprep.mubr.f32.mxu0 0.0
    %683 = vmatmul.mubr.f32.gmra.mrb[0].mxu0 %v519
    %v684 = vpop.f32.mrb[0].mxu0
    %v685 = vadd.f32 0.0, %v684
    %v686 = vpop.f32.mrb[0].mxu0
    %687 = vmatprep.mubr.f32.mxu0 0.0
    %688 = vmatmul.mubr.f32.gmra.mrb[0].mxu0 %v522
    %v689 = vpop.f32.mrb[0].mxu0
    %v690 = vadd.f32 0.0, %v689
    %v691 = vpop.f32.mrb[0].mxu0
    %692 = vmatprep.mubr.f32.mxu0 0.0
    %693 = vmatmul.mubr.f32.gmra.mrb[0].mxu0 %v525
    %v694 = vpop.f32.mrb[0].mxu0
    %v695 = vadd.f32 0.0, %v694
    %v696 = vpop.f32.mrb[0].mxu0
    %697 = vmatprep.mubr.f32.mxu0 0.0
    %698 = vmatmul.mubr.f32.gmra.mrb[0].mxu0 %v528
    %v699 = vpop.f32.mrb[0].mxu0
    %v700 = vadd.f32 0.0, %v699
    %v701 = vpop.f32.mrb[0].mxu0
    %702 = vmatprep.mubr.f32.mxu0 0.0
    %703 = vmatmul.mubr.f32.gmra.mrb[0].mxu0 %v531
    %v704 = vpop.f32.mrb[0].mxu0
    %v705 = vadd.f32 0.0, %v704
    %v706 = vpop.f32.mrb[0].mxu0
    %707 = vmatprep.mubr.f32.mxu0 0.0
    %708 = vmatmul.mubr.f32.gmra.mrb[0].mxu0 %v534
    %v709 = vpop.f32.mrb[0].mxu0
    %v710 = vadd.f32 0.0, %v709
    %v711 = vpop.f32.mrb[0].mxu0
    %712 = vmatprep.mubr.f32.mxu0 0.0
    %713 = vmatmul.mubr.f32.gmra.mrb[0].mxu0 %v537
    %v714 = vpop.f32.mrb[0].mxu0
    %v715 = vadd.f32 0.0, %v714
    %v716 = vpop.f32.mrb[0].mxu0
    %717 = vmatprep.mubr.f32.mxu0 0.0
    %718 = vmatmul.mubr.f32.gmra.mrb[0].mxu0 %v540
    %v719 = vpop.f32.mrb[0].mxu0
    %v720 = vadd.f32 0.0, %v719
    %v721 = vpop.f32.mrb[0].mxu0
    %722 = vmatprep.mubr.f32.mxu0 0.0
    %723 = vmatmul.mubr.f32.gmra.mrb[0].mxu0 %v543
    %v724 = vpop.f32.mrb[0].mxu0
    %v725 = vadd.f32 0.0, %v724
    %v726 = vpop.f32.mrb[0].mxu0
    %727 = vmatprep.mubr.f32.mxu0 0.0
    %728 = vmatmul.mubr.f32.gmra.mrb[0].mxu0 %v546
    %v729 = vpop.f32.mrb[0].mxu0
    %v730 = vadd.f32 0.0, %v729
    %v731 = vpop.f32.mrb[0].mxu0
    %732 = vmatprep.mubr.f32.mxu0 0.0
    %733 = vmatmul.mubr.f32.gmra.mrb[0].mxu0 %v549
    %v734 = vpop.f32.mrb[0].mxu0
    %v735 = vadd.f32 0.0, %v734
    %v736 = vpop.f32.mrb[0].mxu0
    %737 = vmatprep.mubr.f32.mxu0 0.0
    %738 = vmatmul.mubr.f32.gmra.mrb[0].mxu0 %v552
    %v739 = vpop.f32.mrb[0].mxu0
    %v740 = vadd.f32 0.0, %v739
    %v741 = vpop.f32.mrb[0].mxu0
    %742 = vmatprep.mubr.f32.mxu0 0.0
    %743 = vmatmul.mubr.f32.gmra.mrb[0].mxu0 %v555
    %v744 = vpop.f32.mrb[0].mxu0
    %v745 = vadd.f32 0.0, %v744
    %v746 = vpop.f32.mrb[0].mxu0
    %747 = vmatprep.mubr.f32.mxu0 0.0
    %748 = vmatmul.mubr.f32.gmra.mrb[0].mxu0 %v558
    %v749 = vpop.f32.mrb[0].mxu0
    %v750 = vadd.f32 0.0, %v749
    %v751 = vpop.f32.mrb[0].mxu0
    %752 = vmatprep.mubr.f32.mxu0 0.0
    %753 = vmatmul.mubr.f32.gmra.mrb[0].mxu0 %v561
    %v754 = vpop.f32.mrb[0].mxu0
    %v755 = vadd.f32 0.0, %v754
    %v756 = vpop.f32.mrb[0].mxu0
    %757 = vmatprep.mubr.f32.mxu0 0.0
    %758 = vmatmul.mubr.f32.gmra.mrb[0].mxu0 %v564
    %v759 = vpop.f32.mrb[0].mxu0
    %v760 = vadd.f32 0.0, %v759
    %v761 = vpop.f32.mrb[0].mxu0
    %762 = vmatprep.mubr.f32.mxu0 0.0
    %763 = vmatmul.mubr.f32.gmra.mrb[0].mxu0 %v567
    %v764 = vpop.f32.mrb[0].mxu0
    %v765 = vadd.f32 0.0, %v764
    %v766 = vpop.f32.mrb[0].mxu0
    %767 = vmatprep.mubr.f32.mxu0 0.0
    %768 = vmatmul.mubr.f32.gmra.mrb[0].mxu0 %v570
    %v769 = vpop.f32.mrb[0].mxu0
    %v770 = vadd.f32 0.0, %v769
    %v771 = vpop.f32.mrb[0].mxu0
    %772 = vmatprep.mubr.f32.mxu0 0.0
    %773 = vmatmul.mubr.f32.gmra.mrb[0].mxu0 %v573
    %v774 = vpop.f32.mrb[0].mxu0
    %v775 = vadd.f32 0.0, %v774
    %v776 = vpop.f32.mrb[0].mxu0
    %777 = vmatprep.mubr.f32.mxu0 0.0
    %778 = vmatmul.mubr.f32.gmra.mrb[0].mxu0 %v576
    %v779 = vpop.f32.mrb[0].mxu0
    %v780 = vadd.f32 0.0, %v779
    %v781 = vpop.f32.mrb[0].mxu0
    %782 = vmatprep.mubr.f32.mxu0 0.0
    %783 = vmatmul.mubr.f32.gmra.mrb[0].mxu0 %v579
    %v784 = vpop.f32.mrb[0].mxu0
    %v785 = vadd.f32 0.0, %v784
    %v786 = vpop.f32.mrb[0].mxu0
    %787 = vmatprep.mubr.f32.mxu0 0.0
    %788 = vmatmul.mubr.f32.gmra.mrb[0].mxu0 %v582
    %v789 = vpop.f32.mrb[0].mxu0
    %v790 = vadd.f32 0.0, %v789
    %v791 = vpop.f32.mrb[0].mxu0
    %792 = vmatprep.mubr.f32.mxu0 0.0
    %793 = vmatmul.mubr.f32.gmra.mrb[0].mxu0 %v585
    %v794 = vpop.f32.mrb[0].mxu0
    %v795 = vadd.f32 0.0, %v794
    %v796 = vpop.f32.mrb[0].mxu0
    %797 = vmatprep.mubr.f32.mxu0 0.0
    %798 = vmatmul.mubr.f32.gmra.mrb[0].mxu0 %v588
    %v799 = vpop.f32.mrb[0].mxu0
    %v800 = vadd.f32 0.0, %v799
    %v801 = vpop.f32.mrb[0].mxu0
    %802 = vmatprep.mubr.f32.mxu0 0.0
    %803 = vmatmul.mubr.f32.gmra.mrb[0].mxu0 %v591
    %v804 = vpop.f32.mrb[0].mxu0
    %v805 = vadd.f32 0.0, %v804
    %v806 = vpop.f32.mrb[0].mxu0
    %807 = vmatprep.mubr.f32.mxu0 0.0
    %808 = vmatmul.mubr.f32.gmra.mrb[0].mxu0 %v594
    %v809 = vpop.f32.mrb[0].mxu0
    %v810 = vadd.f32 0.0, %v809
    %v811 = vpop.f32.mrb[0].mxu0
    %812 = vmatprep.mubr.f32.mxu0 0.0
    %813 = vmatmul.mubr.f32.gmra.mrb[0].mxu0 %v597
    %v814 = vpop.f32.mrb[0].mxu0
    %v815 = vadd.f32 0.0, %v814
    %v816 = vpop.f32.mrb[0].mxu0
    %817 = vmatprep.mubr.f32.mxu0 0.0
    %818 = vmatmul.mubr.f32.gmra.mrb[0].mxu0 %v600
    %v819 = vpop.f32.mrb[0].mxu0
    %v820 = vadd.f32 0.0, %v819
    %v821 = vpop.f32.mrb[0].mxu0
    %822 = vmatprep.mubr.f32.mxu0 0.0
    %823 = vmatmul.mubr.f32.gmra.mrb[0].mxu0 %v603
    %v824 = vpop.f32.mrb[0].mxu0
    %v825 = vadd.f32 0.0, %v824
    %v826 = vpop.f32.mrb[0].mxu0
    %827 = vmatprep.mubr.f32.mxu0 0.0
    %828 = vmatmul.mubr.f32.gmra.mrb[0].mxu0 %v606
    %v829 = vpop.f32.mrb[0].mxu0
    %v830 = vadd.f32 0.0, %v829
    %v831 = vpop.f32.mrb[0].mxu0
    %832 = vdwg.mxu0
    %833 = vxpose.xlu0.b32.start [1/16] %v675, 128
    %834 = vxpose.xlu0.b32.cont [2/16] %v680, 128
    %835 = vxpose.xlu0.b32.cont [3/16] %v685, 128
    %836 = vxpose.xlu0.b32.cont [4/16] %v690, 128
    %837 = vxpose.xlu0.b32.cont [5/16] 0.0, 128
    %838 = vxpose.xlu0.b32.cont [6/16] 0.0, 128
    %839 = vxpose.xlu0.b32.cont [7/16] 0.0, 128
    %840 = vxpose.xlu0.b32.cont [8/16] 0.0, 128
    %841 = vxpose.xlu0.b32.cont [9/16] 0.0, 128
    %842 = vxpose.xlu0.b32.cont [10/16] 0.0, 128
    %843 = vxpose.xlu0.b32.cont [11/16] 0.0, 128
    %844 = vxpose.xlu0.b32.cont [12/16] 0.0, 128
    %845 = vxpose.xlu0.b32.cont [13/16] 0.0, 128
    %846 = vxpose.xlu0.b32.cont [14/16] 0.0, 128
    %847 = vxpose.xlu0.b32.cont [15/16] 0.0, 128
    %848 = vxpose.xlu0.b32.end [16/16] 0.0, 128
    %v849 = vpop.trf.xlu0
    %v850 = vpop.trf.xlu0
    %v851 = vpop.trf.xlu0
    %v852 = vpop.trf.xlu0
    %v853 = vpop.trf.xlu0
    %v854 = vpop.trf.xlu0
    %v855 = vpop.trf.xlu0
    %v856 = vpop.trf.xlu0
    %v857 = vpop.trf.xlu0
    %v858 = vpop.trf.xlu0
    %v859 = vpop.trf.xlu0
    %v860 = vpop.trf.xlu0
    %v861 = vpop.trf.xlu0
    %v862 = vpop.trf.xlu0
    %v863 = vpop.trf.xlu0
    %v864 = vpop.trf.xlu0
    %865 = vxpose.xlu0.b32.start [1/16] %v695, 128
    %866 = vxpose.xlu0.b32.cont [2/16] %v700, 128
    %867 = vxpose.xlu0.b32.cont [3/16] %v705, 128
    %868 = vxpose.xlu0.b32.cont [4/16] %v710, 128
    %869 = vxpose.xlu0.b32.cont [5/16] 0.0, 128
    %870 = vxpose.xlu0.b32.cont [6/16] 0.0, 128
    %871 = vxpose.xlu0.b32.cont [7/16] 0.0, 128
    %872 = vxpose.xlu0.b32.cont [8/16] 0.0, 128
    %873 = vxpose.xlu0.b32.cont [9/16] 0.0, 128
    %874 = vxpose.xlu0.b32.cont [10/16] 0.0, 128
    %875 = vxpose.xlu0.b32.cont [11/16] 0.0, 128
    %876 = vxpose.xlu0.b32.cont [12/16] 0.0, 128
    %877 = vxpose.xlu0.b32.cont [13/16] 0.0, 128
    %878 = vxpose.xlu0.b32.cont [14/16] 0.0, 128
    %879 = vxpose.xlu0.b32.cont [15/16] 0.0, 128
    %880 = vxpose.xlu0.b32.end [16/16] 0.0, 128
    %v881 = vpop.trf.xlu0
    %v882 = vpop.trf.xlu0
    %v883 = vpop.trf.xlu0
    %v884 = vpop.trf.xlu0
    %v885 = vpop.trf.xlu0
    %v886 = vpop.trf.xlu0
    %v887 = vpop.trf.xlu0
    %v888 = vpop.trf.xlu0
    %v889 = vpop.trf.xlu0
    %v890 = vpop.trf.xlu0
    %v891 = vpop.trf.xlu0
    %v892 = vpop.trf.xlu0
    %v893 = vpop.trf.xlu0
    %v894 = vpop.trf.xlu0
    %v895 = vpop.trf.xlu0
    %v896 = vpop.trf.xlu0
    %897 = vxpose.xlu0.b32.start [1/16] %v715, 128
    %898 = vxpose.xlu0.b32.cont [2/16] %v720, 128
    %899 = vxpose.xlu0.b32.cont [3/16] %v725, 128
    %900 = vxpose.xlu0.b32.cont [4/16] %v730, 128
    %901 = vxpose.xlu0.b32.cont [5/16] 0.0, 128
    %902 = vxpose.xlu0.b32.cont [6/16] 0.0, 128
    %903 = vxpose.xlu0.b32.cont [7/16] 0.0, 128
    %904 = vxpose.xlu0.b32.cont [8/16] 0.0, 128
    %905 = vxpose.xlu0.b32.cont [9/16] 0.0, 128
    %906 = vxpose.xlu0.b32.cont [10/16] 0.0, 128
    %907 = vxpose.xlu0.b32.cont [11/16] 0.0, 128
    %908 = vxpose.xlu0.b32.cont [12/16] 0.0, 128
    %909 = vxpose.xlu0.b32.cont [13/16] 0.0, 128
    %910 = vxpose.xlu0.b32.cont [14/16] 0.0, 128
    %911 = vxpose.xlu0.b32.cont [15/16] 0.0, 128
    %912 = vxpose.xlu0.b32.end [16/16] 0.0, 128
    %v913 = vpop.trf.xlu0
    %v914 = vpop.trf.xlu0
    %v915 = vpop.trf.xlu0
    %v916 = vpop.trf.xlu0
    %v917 = vpop.trf.xlu0
    %v918 = vpop.trf.xlu0
    %v919 = vpop.trf.xlu0
    %v920 = vpop.trf.xlu0
    %v921 = vpop.trf.xlu0
    %v922 = vpop.trf.xlu0
    %v923 = vpop.trf.xlu0
    %v924 = vpop.trf.xlu0
    %v925 = vpop.trf.xlu0
    %v926 = vpop.trf.xlu0
    %v927 = vpop.trf.xlu0
    %v928 = vpop.trf.xlu0
    %929 = vxpose.xlu0.b32.start [1/16] %v735, 128
    %930 = vxpose.xlu0.b32.cont [2/16] %v740, 128
    %931 = vxpose.xlu0.b32.cont [3/16] %v745, 128
    %932 = vxpose.xlu0.b32.cont [4/16] %v750, 128
    %933 = vxpose.xlu0.b32.cont [5/16] 0.0, 128
    %934 = vxpose.xlu0.b32.cont [6/16] 0.0, 128
    %935 = vxpose.xlu0.b32.cont [7/16] 0.0, 128
    %936 = vxpose.xlu0.b32.cont [8/16] 0.0, 128
    %937 = vxpose.xlu0.b32.cont [9/16] 0.0, 128
    %938 = vxpose.xlu0.b32.cont [10/16] 0.0, 128
    %939 = vxpose.xlu0.b32.cont [11/16] 0.0, 128
    %940 = vxpose.xlu0.b32.cont [12/16] 0.0, 128
    %941 = vxpose.xlu0.b32.cont [13/16] 0.0, 128
    %942 = vxpose.xlu0.b32.cont [14/16] 0.0, 128
    %943 = vxpose.xlu0.b32.cont [15/16] 0.0, 128
    %944 = vxpose.xlu0.b32.end [16/16] 0.0, 128
    %v945 = vpop.trf.xlu0
    %v946 = vpop.trf.xlu0
    %v947 = vpop.trf.xlu0
    %v948 = vpop.trf.xlu0
    %v949 = vpop.trf.xlu0
    %v950 = vpop.trf.xlu0
    %v951 = vpop.trf.xlu0
    %v952 = vpop.trf.xlu0
    %v953 = vpop.trf.xlu0
    %v954 = vpop.trf.xlu0
    %v955 = vpop.trf.xlu0
    %v956 = vpop.trf.xlu0
    %v957 = vpop.trf.xlu0
    %v958 = vpop.trf.xlu0
    %v959 = vpop.trf.xlu0
    %v960 = vpop.trf.xlu0
    %961 = vxpose.xlu0.b32.start [1/16] %v755, 128
    %962 = vxpose.xlu0.b32.cont [2/16] %v760, 128
    %963 = vxpose.xlu0.b32.cont [3/16] %v765, 128
    %964 = vxpose.xlu0.b32.cont [4/16] %v770, 128
    %965 = vxpose.xlu0.b32.cont [5/16] 0.0, 128
    %966 = vxpose.xlu0.b32.cont [6/16] 0.0, 128
    %967 = vxpose.xlu0.b32.cont [7/16] 0.0, 128
    %968 = vxpose.xlu0.b32.cont [8/16] 0.0, 128
    %969 = vxpose.xlu0.b32.cont [9/16] 0.0, 128
    %970 = vxpose.xlu0.b32.cont [10/16] 0.0, 128
    %971 = vxpose.xlu0.b32.cont [11/16] 0.0, 128
    %972 = vxpose.xlu0.b32.cont [12/16] 0.0, 128
    %973 = vxpose.xlu0.b32.cont [13/16] 0.0, 128
    %974 = vxpose.xlu0.b32.cont [14/16] 0.0, 128
    %975 = vxpose.xlu0.b32.cont [15/16] 0.0, 128
    %976 = vxpose.xlu0.b32.end [16/16] 0.0, 128
    %v977 = vpop.trf.xlu0
    %v978 = vpop.trf.xlu0
    %v979 = vpop.trf.xlu0
    %v980 = vpop.trf.xlu0
    %v981 = vpop.trf.xlu0
    %v982 = vpop.trf.xlu0
    %v983 = vpop.trf.xlu0
    %v984 = vpop.trf.xlu0
    %v985 = vpop.trf.xlu0
    %v986 = vpop.trf.xlu0
    %v987 = vpop.trf.xlu0
    %v988 = vpop.trf.xlu0
    %v989 = vpop.trf.xlu0
    %v990 = vpop.trf.xlu0
    %v991 = vpop.trf.xlu0
    %v992 = vpop.trf.xlu0
    %993 = vxpose.xlu0.b32.start [1/16] %v775, 128
    %994 = vxpose.xlu0.b32.cont [2/16] %v780, 128
    %995 = vxpose.xlu0.b32.cont [3/16] %v785, 128
    %996 = vxpose.xlu0.b32.cont [4/16] %v790, 128
    %997 = vxpose.xlu0.b32.cont [5/16] 0.0, 128
    %998 = vxpose.xlu0.b32.cont [6/16] 0.0, 128
    %999 = vxpose.xlu0.b32.cont [7/16] 0.0, 128
    %1000 = vxpose.xlu0.b32.cont [8/16] 0.0, 128
    %1001 = vxpose.xlu0.b32.cont [9/16] 0.0, 128
    %1002 = vxpose.xlu0.b32.cont [10/16] 0.0, 128
    %1003 = vxpose.xlu0.b32.cont [11/16] 0.0, 128
    %1004 = vxpose.xlu0.b32.cont [12/16] 0.0, 128
    %1005 = vxpose.xlu0.b32.cont [13/16] 0.0, 128
    %1006 = vxpose.xlu0.b32.cont [14/16] 0.0, 128
    %1007 = vxpose.xlu0.b32.cont [15/16] 0.0, 128
    %1008 = vxpose.xlu0.b32.end [16/16] 0.0, 128
    %v1009 = vpop.trf.xlu0
    %v1010 = vpop.trf.xlu0
    %v1011 = vpop.trf.xlu0
    %v1012 = vpop.trf.xlu0
    %v1013 = vpop.trf.xlu0
    %v1014 = vpop.trf.xlu0
    %v1015 = vpop.trf.xlu0
    %v1016 = vpop.trf.xlu0
    %v1017 = vpop.trf.xlu0
    %v1018 = vpop.trf.xlu0
    %v1019 = vpop.trf.xlu0
    %v1020 = vpop.trf.xlu0
    %v1021 = vpop.trf.xlu0
    %v1022 = vpop.trf.xlu0
    %v1023 = vpop.trf.xlu0
    %v1024 = vpop.trf.xlu0
    %1025 = vxpose.xlu0.b32.start [1/16] %v795, 128
    %1026 = vxpose.xlu0.b32.cont [2/16] %v800, 128
    %1027 = vxpose.xlu0.b32.cont [3/16] %v805, 128
    %1028 = vxpose.xlu0.b32.cont [4/16] %v810, 128
    %1029 = vxpose.xlu0.b32.cont [5/16] 0.0, 128
    %1030 = vxpose.xlu0.b32.cont [6/16] 0.0, 128
    %1031 = vxpose.xlu0.b32.cont [7/16] 0.0, 128
    %1032 = vxpose.xlu0.b32.cont [8/16] 0.0, 128
    %1033 = vxpose.xlu0.b32.cont [9/16] 0.0, 128
    %1034 = vxpose.xlu0.b32.cont [10/16] 0.0, 128
    %1035 = vxpose.xlu0.b32.cont [11/16] 0.0, 128
    %1036 = vxpose.xlu0.b32.cont [12/16] 0.0, 128
    %1037 = vxpose.xlu0.b32.cont [13/16] 0.0, 128
    %1038 = vxpose.xlu0.b32.cont [14/16] 0.0, 128
    %1039 = vxpose.xlu0.b32.cont [15/16] 0.0, 128
    %1040 = vxpose.xlu0.b32.end [16/16] 0.0, 128
    %v1041 = vpop.trf.xlu0
    %v1042 = vpop.trf.xlu0
    %v1043 = vpop.trf.xlu0
    %v1044 = vpop.trf.xlu0
    %v1045 = vpop.trf.xlu0
    %v1046 = vpop.trf.xlu0
    %v1047 = vpop.trf.xlu0
    %v1048 = vpop.trf.xlu0
    %v1049 = vpop.trf.xlu0
    %v1050 = vpop.trf.xlu0
    %v1051 = vpop.trf.xlu0
    %v1052 = vpop.trf.xlu0
    %v1053 = vpop.trf.xlu0
    %v1054 = vpop.trf.xlu0
    %v1055 = vpop.trf.xlu0
    %v1056 = vpop.trf.xlu0
    %1057 = vxpose.xlu0.b32.start [1/16] %v815, 128
    %1058 = vxpose.xlu0.b32.cont [2/16] %v820, 128
    %1059 = vxpose.xlu0.b32.cont [3/16] %v825, 128
    %1060 = vxpose.xlu0.b32.cont [4/16] %v830, 128
    %1061 = vxpose.xlu0.b32.cont [5/16] 0.0, 128
    %1062 = vxpose.xlu0.b32.cont [6/16] 0.0, 128
    %1063 = vxpose.xlu0.b32.cont [7/16] 0.0, 128
    %1064 = vxpose.xlu0.b32.cont [8/16] 0.0, 128
    %1065 = vxpose.xlu0.b32.cont [9/16] 0.0, 128
    %1066 = vxpose.xlu0.b32.cont [10/16] 0.0, 128
    %1067 = vxpose.xlu0.b32.cont [11/16] 0.0, 128
    %1068 = vxpose.xlu0.b32.cont [12/16] 0.0, 128
    %1069 = vxpose.xlu0.b32.cont [13/16] 0.0, 128
    %1070 = vxpose.xlu0.b32.cont [14/16] 0.0, 128
    %1071 = vxpose.xlu0.b32.cont [15/16] 0.0, 128
    %1072 = vxpose.xlu0.b32.end [16/16] 0.0, 128
    %v1073 = vpop.trf.xlu0
    %v1074 = vpop.trf.xlu0
    %v1075 = vpop.trf.xlu0
    %v1076 = vpop.trf.xlu0
    %v1077 = vpop.trf.xlu0
    %v1078 = vpop.trf.xlu0
    %v1079 = vpop.trf.xlu0
    %v1080 = vpop.trf.xlu0
    %v1081 = vpop.trf.xlu0
    %v1082 = vpop.trf.xlu0
    %v1083 = vpop.trf.xlu0
    %v1084 = vpop.trf.xlu0
    %v1085 = vpop.trf.xlu0
    %v1086 = vpop.trf.xlu0
    %v1087 = vpop.trf.xlu0
    %v1088 = vpop.trf.xlu0
    %v1089 = vcombine.low %v849, %v913
    %v1090 = vcombine.high %v849, %v913
    %v1092 = vunpack.c.l.s4 1983009808
    %v1093 = vunpack.c.0.s8 %v1092
    %v1094 = vlaneseq
    %v1095 = vshrl.u32 %v1094, 7
    %v1096 = vsub.s32 %v1093, %v1095
    %v1097 = vrot.slane %v1089, %v1096
    %v1099 = vunpack.c.l.s4 1983009808
    %v1100 = vunpack.c.0.s8 %v1099
    %v1101 = vlaneseq
    %v1102 = vshrl.u32 %v1101, 7
    %v1103 = vsub.s32 %v1100, %v1102
    %v1104 = vrot.slane %v1090, %v1103
    %v1105 = vcombine.low %v881, %v945
    %v1106 = vcombine.high %v881, %v945
    %v1108 = vunpack.c.l.s4 1983009808
    %v1109 = vunpack.c.0.s8 %v1108
    %v1110 = vlaneseq
    %v1111 = vshrl.u32 %v1110, 7
    %v1112 = vsub.s32 %v1109, %v1111
    %v1113 = vrot.slane %v1105, %v1112
    %v1115 = vunpack.c.l.s4 1983009808
    %v1116 = vunpack.c.0.s8 %v1115
    %v1117 = vlaneseq
    %v1118 = vshrl.u32 %v1117, 7
    %v1119 = vsub.s32 %v1116, %v1118
    %v1120 = vrot.slane %v1106, %v1119
    %v1121 = vcombine.low %v977, %v1041
    %v1122 = vcombine.high %v977, %v1041
    %v1124 = vunpack.c.l.s4 1983009808
    %v1125 = vunpack.c.0.s8 %v1124
    %v1126 = vlaneseq
    %v1127 = vshrl.u32 %v1126, 7
    %v1128 = vsub.s32 %v1125, %v1127
    %v1129 = vrot.slane %v1121, %v1128
    %v1131 = vunpack.c.l.s4 1983009808
    %v1132 = vunpack.c.0.s8 %v1131
    %v1133 = vlaneseq
    %v1134 = vshrl.u32 %v1133, 7
    %v1135 = vsub.s32 %v1132, %v1134
    %v1136 = vrot.slane %v1122, %v1135
    %v1137 = vcombine.low %v1009, %v1073
    %v1138 = vcombine.high %v1009, %v1073
    %v1140 = vunpack.c.l.s4 1983009808
    %v1141 = vunpack.c.0.s8 %v1140
    %v1142 = vlaneseq
    %v1143 = vshrl.u32 %v1142, 7
    %v1144 = vsub.s32 %v1141, %v1143
    %v1145 = vrot.slane %v1137, %v1144
    %v1147 = vunpack.c.l.s4 1983009808
    %v1148 = vunpack.c.0.s8 %v1147
    %v1149 = vlaneseq
    %v1150 = vshrl.u32 %v1149, 7
    %v1151 = vsub.s32 %v1148, %v1150
    %v1152 = vrot.slane %v1138, %v1151
    %v1153 = vcombine.low %v1097, %v1113
    %v1154 = vcombine.high %v1097, %v1113
    %v1156 = vunpack.c.l.s4 1934713408
    %v1157 = vunpack.c.0.s8 %v1156
    %v1158 = vlaneseq
    %v1159 = vshrl.u32 %v1158, 7
    %v1160 = vsub.s32 %v1157, %v1159
    %v1161 = vrot.slane %v1153, %v1160
    %v1163 = vunpack.c.l.s4 1934713408
    %v1164 = vunpack.c.0.s8 %v1163
    %v1165 = vlaneseq
    %v1166 = vshrl.u32 %v1165, 7
    %v1167 = vsub.s32 %v1164, %v1166
    %v1168 = vrot.slane %v1154, %v1167
    %v1169 = vcombine.low %v1104, %v1120
    %v1170 = vcombine.high %v1104, %v1120
    %v1172 = vunpack.c.l.s4 1934713408
    %v1173 = vunpack.c.0.s8 %v1172
    %v1174 = vlaneseq
    %v1175 = vshrl.u32 %v1174, 7
    %v1176 = vsub.s32 %v1173, %v1175
    %v1177 = vrot.slane %v1169, %v1176
    %v1179 = vunpack.c.l.s4 1934713408
    %v1180 = vunpack.c.0.s8 %v1179
    %v1181 = vlaneseq
    %v1182 = vshrl.u32 %v1181, 7
    %v1183 = vsub.s32 %v1180, %v1182
    %v1184 = vrot.slane %v1170, %v1183
    %v1185 = vcombine.low %v1129, %v1145
    %v1186 = vcombine.high %v1129, %v1145
    %v1188 = vunpack.c.l.s4 1934713408
    %v1189 = vunpack.c.0.s8 %v1188
    %v1190 = vlaneseq
    %v1191 = vshrl.u32 %v1190, 7
    %v1192 = vsub.s32 %v1189, %v1191
    %v1193 = vrot.slane %v1185, %v1192
    %v1195 = vunpack.c.l.s4 1934713408
    %v1196 = vunpack.c.0.s8 %v1195
    %v1197 = vlaneseq
    %v1198 = vshrl.u32 %v1197, 7
    %v1199 = vsub.s32 %v1196, %v1198
    %v1200 = vrot.slane %v1186, %v1199
    %v1201 = vcombine.low %v1136, %v1152
    %v1202 = vcombine.high %v1136, %v1152
    %v1204 = vunpack.c.l.s4 1934713408
    %v1205 = vunpack.c.0.s8 %v1204
    %v1206 = vlaneseq
    %v1207 = vshrl.u32 %v1206, 7
    %v1208 = vsub.s32 %v1205, %v1207
    %v1209 = vrot.slane %v1201, %v1208
    %v1211 = vunpack.c.l.s4 1934713408
    %v1212 = vunpack.c.0.s8 %v1211
    %v1213 = vlaneseq
    %v1214 = vshrl.u32 %v1213, 7
    %v1215 = vsub.s32 %v1212, %v1214
    %v1216 = vrot.slane %v1202, %v1215
    %v1217 = vcombine.low %v1161, %v1193
    %v1218 = vcombine.high %v1161, %v1193
    %v1219 = vcombine.low %v1168, %v1200
    %v1220 = vcombine.high %v1168, %v1200
    %v1221 = vcombine.low %v1177, %v1209
    %v1222 = vcombine.high %v1177, %v1209
    %v1223 = vcombine.low %v1184, %v1216
    %v1224 = vcombine.high %v1184, %v1216
    %v1225 = vcombine.low %v850, %v914
    %v1226 = vcombine.high %v850, %v914
    %v1228 = vunpack.c.l.s4 1983009808
    %v1229 = vunpack.c.0.s8 %v1228
    %v1230 = vlaneseq
    %v1231 = vshrl.u32 %v1230, 7
    %v1232 = vsub.s32 %v1229, %v1231
    %v1233 = vrot.slane %v1225, %v1232
    %v1235 = vunpack.c.l.s4 1983009808
    %v1236 = vunpack.c.0.s8 %v1235
    %v1237 = vlaneseq
    %v1238 = vshrl.u32 %v1237, 7
    %v1239 = vsub.s32 %v1236, %v1238
    %v1240 = vrot.slane %v1226, %v1239
    %v1241 = vcombine.low %v882, %v946
    %v1242 = vcombine.high %v882, %v946
    %v1244 = vunpack.c.l.s4 1983009808
    %v1245 = vunpack.c.0.s8 %v1244
    %v1246 = vlaneseq
    %v1247 = vshrl.u32 %v1246, 7
    %v1248 = vsub.s32 %v1245, %v1247
    %v1249 = vrot.slane %v1241, %v1248
    %v1251 = vunpack.c.l.s4 1983009808
    %v1252 = vunpack.c.0.s8 %v1251
    %v1253 = vlaneseq
    %v1254 = vshrl.u32 %v1253, 7
    %v1255 = vsub.s32 %v1252, %v1254
    %v1256 = vrot.slane %v1242, %v1255
    %v1257 = vcombine.low %v978, %v1042
    %v1258 = vcombine.high %v978, %v1042
    %v1260 = vunpack.c.l.s4 1983009808
    %v1261 = vunpack.c.0.s8 %v1260
    %v1262 = vlaneseq
    %v1263 = vshrl.u32 %v1262, 7
    %v1264 = vsub.s32 %v1261, %v1263
    %v1265 = vrot.slane %v1257, %v1264
    %v1267 = vunpack.c.l.s4 1983009808
    %v1268 = vunpack.c.0.s8 %v1267
    %v1269 = vlaneseq
    %v1270 = vshrl.u32 %v1269, 7
    %v1271 = vsub.s32 %v1268, %v1270
    %v1272 = vrot.slane %v1258, %v1271
    %v1273 = vcombine.low %v1010, %v1074
    %v1274 = vcombine.high %v1010, %v1074
    %v1276 = vunpack.c.l.s4 1983009808
    %v1277 = vunpack.c.0.s8 %v1276
    %v1278 = vlaneseq
    %v1279 = vshrl.u32 %v1278, 7
    %v1280 = vsub.s32 %v1277, %v1279
    %v1281 = vrot.slane %v1273, %v1280
    %v1283 = vunpack.c.l.s4 1983009808
    %v1284 = vunpack.c.0.s8 %v1283
    %v1285 = vlaneseq
    %v1286 = vshrl.u32 %v1285, 7
    %v1287 = vsub.s32 %v1284, %v1286
    %v1288 = vrot.slane %v1274, %v1287
    %v1289 = vcombine.low %v1233, %v1249
    %v1290 = vcombine.high %v1233, %v1249
    %v1292 = vunpack.c.l.s4 1934713408
    %v1293 = vunpack.c.0.s8 %v1292
    %v1294 = vlaneseq
    %v1295 = vshrl.u32 %v1294, 7
    %v1296 = vsub.s32 %v1293, %v1295
    %v1297 = vrot.slane %v1289, %v1296
    %v1299 = vunpack.c.l.s4 1934713408
    %v1300 = vunpack.c.0.s8 %v1299
    %v1301 = vlaneseq
    %v1302 = vshrl.u32 %v1301, 7
    %v1303 = vsub.s32 %v1300, %v1302
    %v1304 = vrot.slane %v1290, %v1303
    %v1305 = vcombine.low %v1240, %v1256
    %v1306 = vcombine.high %v1240, %v1256
    %v1308 = vunpack.c.l.s4 1934713408
    %v1309 = vunpack.c.0.s8 %v1308
    %v1310 = vlaneseq
    %v1311 = vshrl.u32 %v1310, 7
    %v1312 = vsub.s32 %v1309, %v1311
    %v1313 = vrot.slane %v1305, %v1312
    %v1315 = vunpack.c.l.s4 1934713408
    %v1316 = vunpack.c.0.s8 %v1315
    %v1317 = vlaneseq
    %v1318 = vshrl.u32 %v1317, 7
    %v1319 = vsub.s32 %v1316, %v1318
    %v1320 = vrot.slane %v1306, %v1319
    %v1321 = vcombine.low %v1265, %v1281
    %v1322 = vcombine.high %v1265, %v1281
    %v1324 = vunpack.c.l.s4 1934713408
    %v1325 = vunpack.c.0.s8 %v1324
    %v1326 = vlaneseq
    %v1327 = vshrl.u32 %v1326, 7
    %v1328 = vsub.s32 %v1325, %v1327
    %v1329 = vrot.slane %v1321, %v1328
    %v1331 = vunpack.c.l.s4 1934713408
    %v1332 = vunpack.c.0.s8 %v1331
    %v1333 = vlaneseq
    %v1334 = vshrl.u32 %v1333, 7
    %v1335 = vsub.s32 %v1332, %v1334
    %v1336 = vrot.slane %v1322, %v1335
    %v1337 = vcombine.low %v1272, %v1288
    %v1338 = vcombine.high %v1272, %v1288
    %v1340 = vunpack.c.l.s4 1934713408
    %v1341 = vunpack.c.0.s8 %v1340
    %v1342 = vlaneseq
    %v1343 = vshrl.u32 %v1342, 7
    %v1344 = vsub.s32 %v1341, %v1343
    %v1345 = vrot.slane %v1337, %v1344
    %v1347 = vunpack.c.l.s4 1934713408
    %v1348 = vunpack.c.0.s8 %v1347
    %v1349 = vlaneseq
    %v1350 = vshrl.u32 %v1349, 7
    %v1351 = vsub.s32 %v1348, %v1350
    %v1352 = vrot.slane %v1338, %v1351
    %v1353 = vcombine.low %v1297, %v1329
    %v1354 = vcombine.high %v1297, %v1329
    %v1355 = vcombine.low %v1304, %v1336
    %v1356 = vcombine.high %v1304, %v1336
    %v1357 = vcombine.low %v1313, %v1345
    %v1358 = vcombine.high %v1313, %v1345
    %v1359 = vcombine.low %v1320, %v1352
    %v1360 = vcombine.high %v1320, %v1352
    %v1361 = vcombine.low %v851, %v915
    %v1362 = vcombine.high %v851, %v915
    %v1364 = vunpack.c.l.s4 1983009808
    %v1365 = vunpack.c.0.s8 %v1364
    %v1366 = vlaneseq
    %v1367 = vshrl.u32 %v1366, 7
    %v1368 = vsub.s32 %v1365, %v1367
    %v1369 = vrot.slane %v1361, %v1368
    %v1371 = vunpack.c.l.s4 1983009808
    %v1372 = vunpack.c.0.s8 %v1371
    %v1373 = vlaneseq
    %v1374 = vshrl.u32 %v1373, 7
    %v1375 = vsub.s32 %v1372, %v1374
    %v1376 = vrot.slane %v1362, %v1375
    %v1377 = vcombine.low %v883, %v947
    %v1378 = vcombine.high %v883, %v947
    %v1380 = vunpack.c.l.s4 1983009808
    %v1381 = vunpack.c.0.s8 %v1380
    %v1382 = vlaneseq
    %v1383 = vshrl.u32 %v1382, 7
    %v1384 = vsub.s32 %v1381, %v1383
    %v1385 = vrot.slane %v1377, %v1384
    %v1387 = vunpack.c.l.s4 1983009808
    %v1388 = vunpack.c.0.s8 %v1387
    %v1389 = vlaneseq
    %v1390 = vshrl.u32 %v1389, 7
    %v1391 = vsub.s32 %v1388, %v1390
    %v1392 = vrot.slane %v1378, %v1391
    %v1393 = vcombine.low %v979, %v1043
    %v1394 = vcombine.high %v979, %v1043
    %v1396 = vunpack.c.l.s4 1983009808
    %v1397 = vunpack.c.0.s8 %v1396
    %v1398 = vlaneseq
    %v1399 = vshrl.u32 %v1398, 7
    %v1400 = vsub.s32 %v1397, %v1399
    %v1401 = vrot.slane %v1393, %v1400
    %v1403 = vunpack.c.l.s4 1983009808
    %v1404 = vunpack.c.0.s8 %v1403
    %v1405 = vlaneseq
    %v1406 = vshrl.u32 %v1405, 7
    %v1407 = vsub.s32 %v1404, %v1406
    %v1408 = vrot.slane %v1394, %v1407
    %v1409 = vcombine.low %v1011, %v1075
    %v1410 = vcombine.high %v1011, %v1075
    %v1412 = vunpack.c.l.s4 1983009808
    %v1413 = vunpack.c.0.s8 %v1412
    %v1414 = vlaneseq
    %v1415 = vshrl.u32 %v1414, 7
    %v1416 = vsub.s32 %v1413, %v1415
    %v1417 = vrot.slane %v1409, %v1416
    %v1419 = vunpack.c.l.s4 1983009808
    %v1420 = vunpack.c.0.s8 %v1419
    %v1421 = vlaneseq
    %v1422 = vshrl.u32 %v1421, 7
    %v1423 = vsub.s32 %v1420, %v1422
    %v1424 = vrot.slane %v1410, %v1423
    %v1425 = vcombine.low %v1369, %v1385
    %v1426 = vcombine.high %v1369, %v1385
    %v1428 = vunpack.c.l.s4 1934713408
    %v1429 = vunpack.c.0.s8 %v1428
    %v1430 = vlaneseq
    %v1431 = vshrl.u32 %v1430, 7
    %v1432 = vsub.s32 %v1429, %v1431
    %v1433 = vrot.slane %v1425, %v1432
    %v1435 = vunpack.c.l.s4 1934713408
    %v1436 = vunpack.c.0.s8 %v1435
    %v1437 = vlaneseq
    %v1438 = vshrl.u32 %v1437, 7
    %v1439 = vsub.s32 %v1436, %v1438
    %v1440 = vrot.slane %v1426, %v1439
    %v1441 = vcombine.low %v1376, %v1392
    %v1442 = vcombine.high %v1376, %v1392
    %v1444 = vunpack.c.l.s4 1934713408
    %v1445 = vunpack.c.0.s8 %v1444
    %v1446 = vlaneseq
    %v1447 = vshrl.u32 %v1446, 7
    %v1448 = vsub.s32 %v1445, %v1447
    %v1449 = vrot.slane %v1441, %v1448
    %v1451 = vunpack.c.l.s4 1934713408
    %v1452 = vunpack.c.0.s8 %v1451
    %v1453 = vlaneseq
    %v1454 = vshrl.u32 %v1453, 7
    %v1455 = vsub.s32 %v1452, %v1454
    %v1456 = vrot.slane %v1442, %v1455
    %v1457 = vcombine.low %v1401, %v1417
    %v1458 = vcombine.high %v1401, %v1417
    %v1460 = vunpack.c.l.s4 1934713408
    %v1461 = vunpack.c.0.s8 %v1460
    %v1462 = vlaneseq
    %v1463 = vshrl.u32 %v1462, 7
    %v1464 = vsub.s32 %v1461, %v1463
    %v1465 = vrot.slane %v1457, %v1464
    %v1467 = vunpack.c.l.s4 1934713408
    %v1468 = vunpack.c.0.s8 %v1467
    %v1469 = vlaneseq
    %v1470 = vshrl.u32 %v1469, 7
    %v1471 = vsub.s32 %v1468, %v1470
    %v1472 = vrot.slane %v1458, %v1471
    %v1473 = vcombine.low %v1408, %v1424
    %v1474 = vcombine.high %v1408, %v1424
    %v1476 = vunpack.c.l.s4 1934713408
    %v1477 = vunpack.c.0.s8 %v1476
    %v1478 = vlaneseq
    %v1479 = vshrl.u32 %v1478, 7
    %v1480 = vsub.s32 %v1477, %v1479
    %v1481 = vrot.slane %v1473, %v1480
    %v1483 = vunpack.c.l.s4 1934713408
    %v1484 = vunpack.c.0.s8 %v1483
    %v1485 = vlaneseq
    %v1486 = vshrl.u32 %v1485, 7
    %v1487 = vsub.s32 %v1484, %v1486
    %v1488 = vrot.slane %v1474, %v1487
    %v1489 = vcombine.low %v1433, %v1465
    %v1490 = vcombine.high %v1433, %v1465
    %v1491 = vcombine.low %v1440, %v1472
    %v1492 = vcombine.high %v1440, %v1472
    %v1493 = vcombine.low %v1449, %v1481
    %v1494 = vcombine.high %v1449, %v1481
    %v1495 = vcombine.low %v1456, %v1488
    %v1496 = vcombine.high %v1456, %v1488
    %v1497 = vcombine.low %v852, %v916
    %v1498 = vcombine.high %v852, %v916
    %v1500 = vunpack.c.l.s4 1983009808
    %v1501 = vunpack.c.0.s8 %v1500
    %v1502 = vlaneseq
    %v1503 = vshrl.u32 %v1502, 7
    %v1504 = vsub.s32 %v1501, %v1503
    %v1505 = vrot.slane %v1497, %v1504
    %v1507 = vunpack.c.l.s4 1983009808
    %v1508 = vunpack.c.0.s8 %v1507
    %v1509 = vlaneseq
    %v1510 = vshrl.u32 %v1509, 7
    %v1511 = vsub.s32 %v1508, %v1510
    %v1512 = vrot.slane %v1498, %v1511
    %v1513 = vcombine.low %v884, %v948
    %v1514 = vcombine.high %v884, %v948
    %v1516 = vunpack.c.l.s4 1983009808
    %v1517 = vunpack.c.0.s8 %v1516
    %v1518 = vlaneseq
    %v1519 = vshrl.u32 %v1518, 7
    %v1520 = vsub.s32 %v1517, %v1519
    %v1521 = vrot.slane %v1513, %v1520
    %v1523 = vunpack.c.l.s4 1983009808
    %v1524 = vunpack.c.0.s8 %v1523
    %v1525 = vlaneseq
    %v1526 = vshrl.u32 %v1525, 7
    %v1527 = vsub.s32 %v1524, %v1526
    %v1528 = vrot.slane %v1514, %v1527
    %v1529 = vcombine.low %v980, %v1044
    %v1530 = vcombine.high %v980, %v1044
    %v1532 = vunpack.c.l.s4 1983009808
    %v1533 = vunpack.c.0.s8 %v1532
    %v1534 = vlaneseq
    %v1535 = vshrl.u32 %v1534, 7
    %v1536 = vsub.s32 %v1533, %v1535
    %v1537 = vrot.slane %v1529, %v1536
    %v1539 = vunpack.c.l.s4 1983009808
    %v1540 = vunpack.c.0.s8 %v1539
    %v1541 = vlaneseq
    %v1542 = vshrl.u32 %v1541, 7
    %v1543 = vsub.s32 %v1540, %v1542
    %v1544 = vrot.slane %v1530, %v1543
    %v1545 = vcombine.low %v1012, %v1076
    %v1546 = vcombine.high %v1012, %v1076
    %v1548 = vunpack.c.l.s4 1983009808
    %v1549 = vunpack.c.0.s8 %v1548
    %v1550 = vlaneseq
    %v1551 = vshrl.u32 %v1550, 7
    %v1552 = vsub.s32 %v1549, %v1551
    %v1553 = vrot.slane %v1545, %v1552
    %v1555 = vunpack.c.l.s4 1983009808
    %v1556 = vunpack.c.0.s8 %v1555
    %v1557 = vlaneseq
    %v1558 = vshrl.u32 %v1557, 7
    %v1559 = vsub.s32 %v1556, %v1558
    %v1560 = vrot.slane %v1546, %v1559
    %v1561 = vcombine.low %v1505, %v1521
    %v1562 = vcombine.high %v1505, %v1521
    %v1564 = vunpack.c.l.s4 1934713408
    %v1565 = vunpack.c.0.s8 %v1564
    %v1566 = vlaneseq
    %v1567 = vshrl.u32 %v1566, 7
    %v1568 = vsub.s32 %v1565, %v1567
    %v1569 = vrot.slane %v1561, %v1568
    %v1571 = vunpack.c.l.s4 1934713408
    %v1572 = vunpack.c.0.s8 %v1571
    %v1573 = vlaneseq
    %v1574 = vshrl.u32 %v1573, 7
    %v1575 = vsub.s32 %v1572, %v1574
    %v1576 = vrot.slane %v1562, %v1575
    %v1577 = vcombine.low %v1512, %v1528
    %v1578 = vcombine.high %v1512, %v1528
    %v1580 = vunpack.c.l.s4 1934713408
    %v1581 = vunpack.c.0.s8 %v1580
    %v1582 = vlaneseq
    %v1583 = vshrl.u32 %v1582, 7
    %v1584 = vsub.s32 %v1581, %v1583
    %v1585 = vrot.slane %v1577, %v1584
    %v1587 = vunpack.c.l.s4 1934713408
    %v1588 = vunpack.c.0.s8 %v1587
    %v1589 = vlaneseq
    %v1590 = vshrl.u32 %v1589, 7
    %v1591 = vsub.s32 %v1588, %v1590
    %v1592 = vrot.slane %v1578, %v1591
    %v1593 = vcombine.low %v1537, %v1553
    %v1594 = vcombine.high %v1537, %v1553
    %v1596 = vunpack.c.l.s4 1934713408
    %v1597 = vunpack.c.0.s8 %v1596
    %v1598 = vlaneseq
    %v1599 = vshrl.u32 %v1598, 7
    %v1600 = vsub.s32 %v1597, %v1599
    %v1601 = vrot.slane %v1593, %v1600
    %v1603 = vunpack.c.l.s4 1934713408
    %v1604 = vunpack.c.0.s8 %v1603
    %v1605 = vlaneseq
    %v1606 = vshrl.u32 %v1605, 7
    %v1607 = vsub.s32 %v1604, %v1606
    %v1608 = vrot.slane %v1594, %v1607
    %v1609 = vcombine.low %v1544, %v1560
    %v1610 = vcombine.high %v1544, %v1560
    %v1612 = vunpack.c.l.s4 1934713408
    %v1613 = vunpack.c.0.s8 %v1612
    %v1614 = vlaneseq
    %v1615 = vshrl.u32 %v1614, 7
    %v1616 = vsub.s32 %v1613, %v1615
    %v1617 = vrot.slane %v1609, %v1616
    %v1619 = vunpack.c.l.s4 1934713408
    %v1620 = vunpack.c.0.s8 %v1619
    %v1621 = vlaneseq
    %v1622 = vshrl.u32 %v1621, 7
    %v1623 = vsub.s32 %v1620, %v1622
    %v1624 = vrot.slane %v1610, %v1623
    %v1625 = vcombine.low %v1569, %v1601
    %v1626 = vcombine.high %v1569, %v1601
    %v1627 = vcombine.low %v1576, %v1608
    %v1628 = vcombine.high %v1576, %v1608
    %v1629 = vcombine.low %v1585, %v1617
    %v1630 = vcombine.high %v1585, %v1617
    %v1631 = vcombine.low %v1592, %v1624
    %v1632 = vcombine.high %v1592, %v1624
    %1634 = vrot.lane.b32.xlu0 %v1218, 32
    %v1635 = vpop.permute.xlu0 %1634
    %1638 = vrot.lane.b32.xlu0 %v1219, 64
    %v1639 = vpop.permute.xlu0 %1638
    %1642 = vrot.lane.b32.xlu0 %v1220, 96
    %v1643 = vpop.permute.xlu0 %1642
    %1646 = vrot.lane.b32.xlu0 %v1222, 32
    %v1647 = vpop.permute.xlu0 %1646
    %1650 = vrot.lane.b32.xlu0 %v1223, 64
    %v1651 = vpop.permute.xlu0 %1650
    %1654 = vrot.lane.b32.xlu0 %v1224, 96
    %v1655 = vpop.permute.xlu0 %1654
    %1658 = vrot.lane.b32.xlu0 %v1354, 32
    %v1659 = vpop.permute.xlu0 %1658
    %1662 = vrot.lane.b32.xlu0 %v1355, 64
    %v1663 = vpop.permute.xlu0 %1662
    %1666 = vrot.lane.b32.xlu0 %v1356, 96
    %v1667 = vpop.permute.xlu0 %1666
    %1670 = vrot.lane.b32.xlu0 %v1358, 32
    %v1671 = vpop.permute.xlu0 %1670
    %1674 = vrot.lane.b32.xlu0 %v1359, 64
    %v1675 = vpop.permute.xlu0 %1674
    %1678 = vrot.lane.b32.xlu0 %v1360, 96
    %v1679 = vpop.permute.xlu0 %1678
    %1682 = vrot.lane.b32.xlu0 %v1490, 32
    %v1683 = vpop.permute.xlu0 %1682
    %1686 = vrot.lane.b32.xlu0 %v1491, 64
    %v1687 = vpop.permute.xlu0 %1686
    %1690 = vrot.lane.b32.xlu0 %v1492, 96
    %v1691 = vpop.permute.xlu0 %1690
    %1694 = vrot.lane.b32.xlu0 %v1494, 32
    %v1695 = vpop.permute.xlu0 %1694
    %1698 = vrot.lane.b32.xlu0 %v1495, 64
    %v1699 = vpop.permute.xlu0 %1698
    %1702 = vrot.lane.b32.xlu0 %v1496, 96
    %v1703 = vpop.permute.xlu0 %1702
    %1706 = vrot.lane.b32.xlu0 %v1626, 32
    %v1707 = vpop.permute.xlu0 %1706
    %1710 = vrot.lane.b32.xlu0 %v1627, 64
    %v1711 = vpop.permute.xlu0 %1710
    %1714 = vrot.lane.b32.xlu0 %v1628, 96
    %v1715 = vpop.permute.xlu0 %1714
    %1718 = vrot.lane.b32.xlu0 %v1630, 32
    %v1719 = vpop.permute.xlu0 %1718
    %1722 = vrot.lane.b32.xlu0 %v1631, 64
    %v1723 = vpop.permute.xlu0 %1722
    %1726 = vrot.lane.b32.xlu0 %v1632, 96
    %v1727 = vpop.permute.xlu0 %1726
    %vm1729 = vcmask 261120
    %v1730 = vsel %vm1729, %v1217, %v1635
    %vm1731 = vcmask 523264
    %v1732 = vsel %vm1731, %v1730, %v1639
    %vm1733 = vcmask 785408
    %v1734 = vsel %vm1733, %v1732, %v1643
    %v1735 = vsel %vm1729, %v1221, %v1647
    %v1736 = vsel %vm1731, %v1735, %v1651
    %v1737 = vsel %vm1733, %v1736, %v1655
    %v1738 = vsel %vm1729, %v1353, %v1659
    %v1739 = vsel %vm1731, %v1738, %v1663
    %v1740 = vsel %vm1733, %v1739, %v1667
    %v1741 = vsel %vm1729, %v1357, %v1671
    %v1742 = vsel %vm1731, %v1741, %v1675
    %v1743 = vsel %vm1733, %v1742, %v1679
    %v1744 = vsel %vm1729, %v1489, %v1683
    %v1745 = vsel %vm1731, %v1744, %v1687
    %v1746 = vsel %vm1733, %v1745, %v1691
    %v1747 = vsel %vm1729, %v1493, %v1695
    %v1748 = vsel %vm1731, %v1747, %v1699
    %v1749 = vsel %vm1733, %v1748, %v1703
    %v1750 = vsel %vm1729, %v1625, %v1707
    %v1751 = vsel %vm1731, %v1750, %v1711
    %v1752 = vsel %vm1733, %v1751, %v1715
    %v1753 = vsel %vm1729, %v1629, %v1719
    %v1754 = vsel %vm1731, %v1753, %v1723
    %v1755 = vsel %vm1733, %v1754, %v1727
    %1756 = vst [vmem:[%s3] sm:$0xff] %v1734
    %1757 = vst [vmem:[%s3 + $0x8] sm:$0xff] %v1737
    %1758 = vst [vmem:[%s3 + $0x10] sm:$0xff] %v1740
    %1759 = vst [vmem:[%s3 + $0x18] sm:$0xff] %v1743
    %1760 = vst [vmem:[%s3 + $0x20] sm:$0xff] %v1746
    %1761 = vst [vmem:[%s3 + $0x28] sm:$0xff] %v1749
    %1762 = vst [vmem:[%s3 + $0x30] sm:$0xff] %v1752
    %1763 = vst [vmem:[%s3 + $0x38] sm:$0xff] %v1755
    // Predicated region
    $region22: #{_interpolate_opt.1} parent=1 // pred_check
      _
    $region23: #{_interpolate_opt.1} parent=1 // pred_check_branch
      %1765 = sbr.rel (0) target = $region25
    $region24: #{_interpolate_opt.1} parent=1 // pred_region
      _
    $region25: #{_interpolate_opt.1} parent=1 // pred_fallthru
      _
    // Predicated region
    $region26: #{_interpolate_opt.1} parent=1 // pred_check
      _
    $region27: #{_interpolate_opt.1} parent=1 // pred_check_branch
      %1767 = sbr.rel (0) target = $region29
    $region28: #{_interpolate_opt.1} parent=1 // pred_region
      _
    $region29: #{_interpolate_opt.1} parent=1 // pred_fallthru
      _
    %1768 = vsyncpa [#allocation3], 1
    %1769 = vsyncpa [#allocation5], 1

// kernel: _interpolate_safe.1
$region0: #{_interpolate_safe.1}
  #allocation0 [shape = 'u32[]', space=smem, size = 0x4, offset = 0x4, fixed_abs, tag = 'smem constant byte address 0x4 - core index']
  #allocation1 [shape = 'u32[144,128]{1,0:T(1,128)}', space=vmem, size = 0x12000, scoped, tag = 'internal scratch']
  %s0 = inlined_call_operand.vmem [shape: f32[32,16], index: 0, kind: input, shape index: {}]
  %s1 = inlined_call_operand.vmem [shape: f32[16,32], index: 1, kind: input, shape index: {}]
  %s2 = inlined_call_operand.vmem [shape: f32[128,16], index: 2, kind: input, shape index: {}]
  %s3 = inlined_call_operand.hbm [shape: f32[8,32,32], index: 3, kind: output, shape index: {}]
  %s4 = sld [smem:[#allocation0]]
  $region22: #{_interpolate_safe.1} parent=0
    _
  %s6 = ssub.s32 1, %s4
  %s7 = scalar_select 0, %s6, %s4
  $region1: #{_interpolate_safe.1} parent=0
    #allocation2 [shape = 'u8[131072]{0}', space=vmem, size = 0x20000, scoped, tag = 'output window, operand 0, single buffered']
    #allocation3 [shape = 's32[1]{0}', space=sflag, size = 0x4, scoped, tag = 'scoped memory for _interpolate_safe.1']
    %8 = vsyncpa [#allocation3], 0
    // Predicated region
    $region2: #{_interpolate_safe.1} parent=1 // pred_check
      _
    $region3: #{_interpolate_safe.1} parent=1 // pred_check_branch
      %10 = sbr.rel (0) target = $region5
    $region4: #{_interpolate_safe.1} parent=1 // pred_region
      _
    $region5: #{_interpolate_safe.1} parent=1 // pred_fallthru
      _
    // Predicated region
    $region6: #{_interpolate_safe.1} parent=1 // pred_check
      _
    $region7: #{_interpolate_safe.1} parent=1 // pred_check_branch
      %12 = sbr.rel (0) target = $region9
    $region8: #{_interpolate_safe.1} parent=1 // pred_region
      _
    $region9: #{_interpolate_safe.1} parent=1 // pred_fallthru
      _
    // Predicated region
    $region10: #{_interpolate_safe.1} parent=1 // pred_check
      _
    $region11: #{_interpolate_safe.1} parent=1 // pred_check_branch
      %14 = sbr.rel (0) target = $region13
    $region12: #{_interpolate_safe.1} parent=1 // pred_region
      _
    $region13: #{_interpolate_safe.1} parent=1 // pred_fallthru
      _
    %v15 = vld [vmem:[%s2] sm:$0xff]
    %v16 = vld [vmem:[%s2 + $0x8] sm:$0xff]
    %v17 = vld [vmem:[%s2 + $0x10] sm:$0xff]
    %v18 = vld [vmem:[%s2 + $0x18] sm:$0xff]
    %v19 = vld [vmem:[%s2 + $0x20] sm:$0xff]
    %v20 = vld [vmem:[%s2 + $0x28] sm:$0xff]
    %v21 = vld [vmem:[%s2 + $0x30] sm:$0xff]
    %v22 = vld [vmem:[%s2 + $0x38] sm:$0xff]
    %v23 = vld [vmem:[%s2 + $0x40] sm:$0xff]
    %v24 = vld [vmem:[%s2 + $0x48] sm:$0xff]
    %v25 = vld [vmem:[%s2 + $0x50] sm:$0xff]
    %v26 = vld [vmem:[%s2 + $0x58] sm:$0xff]
    %v27 = vld [vmem:[%s2 + $0x60] sm:$0xff]
    %v28 = vld [vmem:[%s2 + $0x68] sm:$0xff]
    %v29 = vld [vmem:[%s2 + $0x70] sm:$0xff]
    %v30 = vld [vmem:[%s2 + $0x78] sm:$0xff]
    %v31 = vld [vmem:[%s1] sm:$0xff]
    %v32 = vld [vmem:[%s1 + $0x8] sm:$0xff]
    %vm33 = vcmask 130048
    %v35 = vsel %vm33, %v15, 0
    %v38 = vsel %vm33, %v16, 0
    %v41 = vsel %vm33, %v17, 0
    %v44 = vsel %vm33, %v18, 0
    %v47 = vsel %vm33, %v19, 0
    %v50 = vsel %vm33, %v20, 0
    %v53 = vsel %vm33, %v21, 0
    %v56 = vsel %vm33, %v22, 0
    %v59 = vsel %vm33, %v23, 0
    %v62 = vsel %vm33, %v24, 0
    %v65 = vsel %vm33, %v25, 0
    %v68 = vsel %vm33, %v26, 0
    %v71 = vsel %vm33, %v27, 0
    %v74 = vsel %vm33, %v28, 0
    %v77 = vsel %vm33, %v29, 0
    %v80 = vsel %vm33, %v30, 0
    %82 = vmatprep.subr.mxu0 0.0
    %83 = vmatpush1.msra.mxu0 %v31
    %84 = vmatprep.subr.mxu0 0.0
    %85 = vmatpush1.msra.mxu0 %v32
    %86 = vmatprep.subr.mxu0 0.0
    %87 = vmatpush1.msra.mxu0 0.0
    %88 = vmatprep.subr.mxu0 0.0
    %89 = vmatpush1.msra.mxu0 0.0
    %90 = vmatprep.subr.mxu0 0.0
    %91 = vmatpush1.msra.mxu0 0.0
    %92 = vmatprep.subr.mxu0 0.0
    %93 = vmatpush1.msra.mxu0 0.0
    %94 = vmatprep.subr.mxu0 0.0
    %95 = vmatpush1.msra.mxu0 0.0
    %96 = vmatprep.subr.mxu0 0.0
    %97 = vmatpush1.msra.mxu0 0.0
    %98 = vmatprep.subr.mxu0 0.0
    %99 = vmatpush1.msra.mxu0 0.0
    %100 = vmatprep.subr.mxu0 0.0
    %101 = vmatpush1.msra.mxu0 0.0
    %102 = vmatprep.subr.mxu0 0.0
    %103 = vmatpush1.msra.mxu0 0.0
    %104 = vmatprep.subr.mxu0 0.0
    %105 = vmatpush1.msra.mxu0 0.0
    %106 = vmatprep.subr.mxu0 0.0
    %107 = vmatpush1.msra.mxu0 0.0
    %108 = vmatprep.subr.mxu0 0.0
    %109 = vmatpush1.msra.mxu0 0.0
    %110 = vmatprep.subr.mxu0 0.0
    %111 = vmatpush1.msra.mxu0 0.0
    %112 = vmatprep.subr.mxu0 0.0
    %113 = vmatpush1.msra.mxu0 0.0
    %114 = vmatprep.subr.mxu0 0.0
    %115 = vmatpush1.msra.mxu0 0.0
    %116 = vmatprep.subr.mxu0 0.0
    %117 = vmatpush1.msra.mxu0 0.0
    %118 = vmatprep.subr.mxu0 0.0
    %119 = vmatpush1.msra.mxu0 0.0
    %120 = vmatprep.subr.mxu0 0.0
    %121 = vmatpush1.msra.mxu0 0.0
    %122 = vmatprep.subr.mxu0 0.0
    %123 = vmatpush1.msra.mxu0 0.0
    %124 = vmatprep.subr.mxu0 0.0
    %125 = vmatpush1.msra.mxu0 0.0
    %126 = vmatprep.subr.mxu0 0.0
    %127 = vmatpush1.msra.mxu0 0.0
    %128 = vmatprep.subr.mxu0 0.0
    %129 = vmatpush1.msra.mxu0 0.0
    %130 = vmatprep.subr.mxu0 0.0
    %131 = vmatpush1.msra.mxu0 0.0
    %132 = vmatprep.subr.mxu0 0.0
    %133 = vmatpush1.msra.mxu0 0.0
    %134 = vmatprep.subr.mxu0 0.0
    %135 = vmatpush1.msra.mxu0 0.0
    %136 = vmatprep.subr.mxu0 0.0
    %137 = vmatpush1.msra.mxu0 0.0
    %138 = vmatprep.subr.mxu0 0.0
    %139 = vmatpush1.msra.mxu0 0.0
    %140 = vmatprep.subr.mxu0 0.0
    %141 = vmatpush1.msra.mxu0 0.0
    %142 = vmatprep.subr.mxu0 0.0
    %143 = vmatpush1.msra.mxu0 0.0
    %144 = vmatprep.subr.mxu0 0.0
    %145 = vmatpush1.msra.mxu0 0.0
    %146 = vmatprep.mubr.f32.mxu0 0.0
    %147 = vmatmul.mubr.f32.gmra.mrb[0].mxu0 %v35
    %v148 = vpop.f32.mrb[0].mxu0
    %v149 = vadd.f32 0.0, %v148
    %v150 = vpop.f32.mrb[0].mxu0
    %151 = vmatprep.mubr.f32.mxu0 0.0
    %152 = vmatmul.mubr.f32.gmra.mrb[0].mxu0 %v38
    %v153 = vpop.f32.mrb[0].mxu0
    %v154 = vadd.f32 0.0, %v153
    %v155 = vpop.f32.mrb[0].mxu0
    %156 = vmatprep.mubr.f32.mxu0 0.0
    %157 = vmatmul.mubr.f32.gmra.mrb[0].mxu0 %v41
    %v158 = vpop.f32.mrb[0].mxu0
    %v159 = vadd.f32 0.0, %v158
    %v160 = vpop.f32.mrb[0].mxu0
    %161 = vmatprep.mubr.f32.mxu0 0.0
    %162 = vmatmul.mubr.f32.gmra.mrb[0].mxu0 %v44
    %v163 = vpop.f32.mrb[0].mxu0
    %v164 = vadd.f32 0.0, %v163
    %v165 = vpop.f32.mrb[0].mxu0
    %166 = vmatprep.mubr.f32.mxu0 0.0
    %167 = vmatmul.mubr.f32.gmra.mrb[0].mxu0 %v47
    %v168 = vpop.f32.mrb[0].mxu0
    %v169 = vadd.f32 0.0, %v168
    %v170 = vpop.f32.mrb[0].mxu0
    %171 = vmatprep.mubr.f32.mxu0 0.0
    %172 = vmatmul.mubr.f32.gmra.mrb[0].mxu0 %v50
    %v173 = vpop.f32.mrb[0].mxu0
    %v174 = vadd.f32 0.0, %v173
    %v175 = vpop.f32.mrb[0].mxu0
    %176 = vmatprep.mubr.f32.mxu0 0.0
    %177 = vmatmul.mubr.f32.gmra.mrb[0].mxu0 %v53
    %v178 = vpop.f32.mrb[0].mxu0
    %v179 = vadd.f32 0.0, %v178
    %v180 = vpop.f32.mrb[0].mxu0
    %181 = vmatprep.mubr.f32.mxu0 0.0
    %182 = vmatmul.mubr.f32.gmra.mrb[0].mxu0 %v56
    %v183 = vpop.f32.mrb[0].mxu0
    %v184 = vadd.f32 0.0, %v183
    %v185 = vpop.f32.mrb[0].mxu0
    %186 = vmatprep.mubr.f32.mxu0 0.0
    %187 = vmatmul.mubr.f32.gmra.mrb[0].mxu0 %v59
    %v188 = vpop.f32.mrb[0].mxu0
    %v189 = vadd.f32 0.0, %v188
    %v190 = vpop.f32.mrb[0].mxu0
    %191 = vmatprep.mubr.f32.mxu0 0.0
    %192 = vmatmul.mubr.f32.gmra.mrb[0].mxu0 %v62
    %v193 = vpop.f32.mrb[0].mxu0
    %v194 = vadd.f32 0.0, %v193
    %v195 = vpop.f32.mrb[0].mxu0
    %196 = vmatprep.mubr.f32.mxu0 0.0
    %197 = vmatmul.mubr.f32.gmra.mrb[0].mxu0 %v65
    %v198 = vpop.f32.mrb[0].mxu0
    %v199 = vadd.f32 0.0, %v198
    %v200 = vpop.f32.mrb[0].mxu0
    %201 = vmatprep.mubr.f32.mxu0 0.0
    %202 = vmatmul.mubr.f32.gmra.mrb[0].mxu0 %v68
    %v203 = vpop.f32.mrb[0].mxu0
    %v204 = vadd.f32 0.0, %v203
    %v205 = vpop.f32.mrb[0].mxu0
    %206 = vmatprep.mubr.f32.mxu0 0.0
    %207 = vmatmul.mubr.f32.gmra.mrb[0].mxu0 %v71
    %v208 = vpop.f32.mrb[0].mxu0
    %v209 = vadd.f32 0.0, %v208
    %v210 = vpop.f32.mrb[0].mxu0
    %211 = vmatprep.mubr.f32.mxu0 0.0
    %212 = vmatmul.mubr.f32.gmra.mrb[0].mxu0 %v74
    %v213 = vpop.f32.mrb[0].mxu0
    %v214 = vadd.f32 0.0, %v213
    %v215 = vpop.f32.mrb[0].mxu0
    %216 = vmatprep.mubr.f32.mxu0 0.0
    %217 = vmatmul.mubr.f32.gmra.mrb[0].mxu0 %v77
    %v218 = vpop.f32.mrb[0].mxu0
    %v219 = vadd.f32 0.0, %v218
    %v220 = vpop.f32.mrb[0].mxu0
    %221 = vmatprep.mubr.f32.mxu0 0.0
    %222 = vmatmul.mubr.f32.gmra.mrb[0].mxu0 %v80
    %v223 = vpop.f32.mrb[0].mxu0
    %v224 = vadd.f32 0.0, %v223
    %v225 = vpop.f32.mrb[0].mxu0
    %226 = vdwg.mxu0
    %v227 = vld [vmem:[%s0] sm:$0xff]
    %v228 = vld [vmem:[%s0 + $0x8] sm:$0xff]
    %v229 = vld [vmem:[%s0 + $0x10] sm:$0xff]
    %v230 = vld [vmem:[%s0 + $0x18] sm:$0xff]
    %v232 = vsel %vm33, %v227, 0
    %v235 = vsel %vm33, %v228, 0
    %v238 = vsel %vm33, %v229, 0
    %v241 = vsel %vm33, %v230, 0
    %243 = vmatprep.subr.mxu0 0.0
    %244 = vmatpush1.msra.mxu0 %v149
    %245 = vmatprep.subr.mxu0 0.0
    %246 = vmatpush1.msra.mxu0 %v154
    %247 = vmatprep.subr.mxu0 0.0
    %248 = vmatpush1.msra.mxu0 0.0
    %249 = vmatprep.subr.mxu0 0.0
    %250 = vmatpush1.msra.mxu0 0.0
    %251 = vmatprep.subr.mxu0 0.0
    %252 = vmatpush1.msra.mxu0 0.0
    %253 = vmatprep.subr.mxu0 0.0
    %254 = vmatpush1.msra.mxu0 0.0
    %255 = vmatprep.subr.mxu0 0.0
    %256 = vmatpush1.msra.mxu0 0.0
    %257 = vmatprep.subr.mxu0 0.0
    %258 = vmatpush1.msra.mxu0 0.0
    %259 = vmatprep.subr.mxu0 0.0
    %260 = vmatpush1.msra.mxu0 0.0
    %261 = vmatprep.subr.mxu0 0.0
    %262 = vmatpush1.msra.mxu0 0.0
    %263 = vmatprep.subr.mxu0 0.0
    %264 = vmatpush1.msra.mxu0 0.0
    %265 = vmatprep.subr.mxu0 0.0
    %266 = vmatpush1.msra.mxu0 0.0
    %267 = vmatprep.subr.mxu0 0.0
    %268 = vmatpush1.msra.mxu0 0.0
    %269 = vmatprep.subr.mxu0 0.0
    %270 = vmatpush1.msra.mxu0 0.0
    %271 = vmatprep.subr.mxu0 0.0
    %272 = vmatpush1.msra.mxu0 0.0
    %273 = vmatprep.subr.mxu0 0.0
    %274 = vmatpush1.msra.mxu0 0.0
    %275 = vmatprep.subr.mxu0 0.0
    %276 = vmatpush1.msra.mxu0 0.0
    %277 = vmatprep.subr.mxu0 0.0
    %278 = vmatpush1.msra.mxu0 0.0
    %279 = vmatprep.subr.mxu0 0.0
    %280 = vmatpush1.msra.mxu0 0.0
    %281 = vmatprep.subr.mxu0 0.0
    %282 = vmatpush1.msra.mxu0 0.0
    %283 = vmatprep.subr.mxu0 0.0
    %284 = vmatpush1.msra.mxu0 0.0
    %285 = vmatprep.subr.mxu0 0.0
    %286 = vmatpush1.msra.mxu0 0.0
    %287 = vmatprep.subr.mxu0 0.0
    %288 = vmatpush1.msra.mxu0 0.0
    %289 = vmatprep.subr.mxu0 0.0
    %290 = vmatpush1.msra.mxu0 0.0
    %291 = vmatprep.subr.mxu0 0.0
    %292 = vmatpush1.msra.mxu0 0.0
    %293 = vmatprep.subr.mxu0 0.0
    %294 = vmatpush1.msra.mxu0 0.0
    %295 = vmatprep.subr.mxu0 0.0
    %296 = vmatpush1.msra.mxu0 0.0
    %297 = vmatprep.subr.mxu0 0.0
    %298 = vmatpush1.msra.mxu0 0.0
    %299 = vmatprep.subr.mxu0 0.0
    %300 = vmatpush1.msra.mxu0 0.0
    %301 = vmatprep.subr.mxu0 0.0
    %302 = vmatpush1.msra.mxu0 0.0
    %303 = vmatprep.subr.mxu0 0.0
    %304 = vmatpush1.msra.mxu0 0.0
    %305 = vmatprep.subr.mxu0 0.0
    %306 = vmatpush1.msra.mxu0 0.0
    %307 = vmatprep.mubr.f32.mxu0 0.0
    %308 = vmatmul.mubr.f32.gmra.mrb[0].mxu0 %v232
    %v309 = vpop.f32.mrb[0].mxu0
    %v310 = vadd.f32 0.0, %v309
    %v311 = vpop.f32.mrb[0].mxu0
    %312 = vmatprep.mubr.f32.mxu0 0.0
    %313 = vmatmul.mubr.f32.gmra.mrb[0].mxu0 %v235
    %v314 = vpop.f32.mrb[0].mxu0
    %v315 = vadd.f32 0.0, %v314
    %v316 = vpop.f32.mrb[0].mxu0
    %317 = vmatprep.mubr.f32.mxu0 0.0
    %318 = vmatmul.mubr.f32.gmra.mrb[0].mxu0 %v238
    %v319 = vpop.f32.mrb[0].mxu0
    %v320 = vadd.f32 0.0, %v319
    %v321 = vpop.f32.mrb[0].mxu0
    %322 = vmatprep.mubr.f32.mxu0 0.0
    %323 = vmatmul.mubr.f32.gmra.mrb[0].mxu0 %v241
    %v324 = vpop.f32.mrb[0].mxu0
    %v325 = vadd.f32 0.0, %v324
    %v326 = vpop.f32.mrb[0].mxu0
    %327 = vdwg.mxu0
    %vm328 = vcmask 261120
    %329 = vst.msk [vmem:[#allocation2] sm:$0xff] %vm328, %v310
    %330 = vst.msk [vmem:[#allocation2 + $0x8] sm:$0xff] %vm328, %v315
    %331 = vst.msk [vmem:[#allocation2 + $0x10] sm:$0xff] %vm328, %v320
    %332 = vst.msk [vmem:[#allocation2 + $0x18] sm:$0xff] %vm328, %v325
    %333 = vmatprep.subr.mxu0 0.0
    %334 = vmatpush1.msra.mxu0 %v159
    %335 = vmatprep.subr.mxu0 0.0
    %336 = vmatpush1.msra.mxu0 %v164
    %337 = vmatprep.subr.mxu0 0.0
    %338 = vmatpush1.msra.mxu0 0.0
    %339 = vmatprep.subr.mxu0 0.0
    %340 = vmatpush1.msra.mxu0 0.0
    %341 = vmatprep.subr.mxu0 0.0
    %342 = vmatpush1.msra.mxu0 0.0
    %343 = vmatprep.subr.mxu0 0.0
    %344 = vmatpush1.msra.mxu0 0.0
    %345 = vmatprep.subr.mxu0 0.0
    %346 = vmatpush1.msra.mxu0 0.0
    %347 = vmatprep.subr.mxu0 0.0
    %348 = vmatpush1.msra.mxu0 0.0
    %349 = vmatprep.subr.mxu0 0.0
    %350 = vmatpush1.msra.mxu0 0.0
    %351 = vmatprep.subr.mxu0 0.0
    %352 = vmatpush1.msra.mxu0 0.0
    %353 = vmatprep.subr.mxu0 0.0
    %354 = vmatpush1.msra.mxu0 0.0
    %355 = vmatprep.subr.mxu0 0.0
    %356 = vmatpush1.msra.mxu0 0.0
    %357 = vmatprep.subr.mxu0 0.0
    %358 = vmatpush1.msra.mxu0 0.0
    %359 = vmatprep.subr.mxu0 0.0
    %360 = vmatpush1.msra.mxu0 0.0
    %361 = vmatprep.subr.mxu0 0.0
    %362 = vmatpush1.msra.mxu0 0.0
    %363 = vmatprep.subr.mxu0 0.0
    %364 = vmatpush1.msra.mxu0 0.0
    %365 = vmatprep.subr.mxu0 0.0
    %366 = vmatpush1.msra.mxu0 0.0
    %367 = vmatprep.subr.mxu0 0.0
    %368 = vmatpush1.msra.mxu0 0.0
    %369 = vmatprep.subr.mxu0 0.0
    %370 = vmatpush1.msra.mxu0 0.0
    %371 = vmatprep.subr.mxu0 0.0
    %372 = vmatpush1.msra.mxu0 0.0
    %373 = vmatprep.subr.mxu0 0.0
    %374 = vmatpush1.msra.mxu0 0.0
    %375 = vmatprep.subr.mxu0 0.0
    %376 = vmatpush1.msra.mxu0 0.0
    %377 = vmatprep.subr.mxu0 0.0
    %378 = vmatpush1.msra.mxu0 0.0
    %379 = vmatprep.subr.mxu0 0.0
    %380 = vmatpush1.msra.mxu0 0.0
    %381 = vmatprep.subr.mxu0 0.0
    %382 = vmatpush1.msra.mxu0 0.0
    %383 = vmatprep.subr.mxu0 0.0
    %384 = vmatpush1.msra.mxu0 0.0
    %385 = vmatprep.subr.mxu0 0.0
    %386 = vmatpush1.msra.mxu0 0.0
    %387 = vmatprep.subr.mxu0 0.0
    %388 = vmatpush1.msra.mxu0 0.0
    %389 = vmatprep.subr.mxu0 0.0
    %390 = vmatpush1.msra.mxu0 0.0
    %391 = vmatprep.subr.mxu0 0.0
    %392 = vmatpush1.msra.mxu0 0.0
    %393 = vmatprep.subr.mxu0 0.0
    %394 = vmatpush1.msra.mxu0 0.0
    %395 = vmatprep.subr.mxu0 0.0
    %396 = vmatpush1.msra.mxu0 0.0
    %397 = vmatprep.mubr.f32.mxu0 0.0
    %398 = vmatmul.mubr.f32.gmra.mrb[0].mxu0 %v232
    %v399 = vpop.f32.mrb[0].mxu0
    %v400 = vadd.f32 0.0, %v399
    %v401 = vpop.f32.mrb[0].mxu0
    %402 = vmatprep.mubr.f32.mxu0 0.0
    %403 = vmatmul.mubr.f32.gmra.mrb[0].mxu0 %v235
    %v404 = vpop.f32.mrb[0].mxu0
    %v405 = vadd.f32 0.0, %v404
    %v406 = vpop.f32.mrb[0].mxu0
    %407 = vmatprep.mubr.f32.mxu0 0.0
    %408 = vmatmul.mubr.f32.gmra.mrb[0].mxu0 %v238
    %v409 = vpop.f32.mrb[0].mxu0
    %v410 = vadd.f32 0.0, %v409
    %v411 = vpop.f32.mrb[0].mxu0
    %412 = vmatprep.mubr.f32.mxu0 0.0
    %413 = vmatmul.mubr.f32.gmra.mrb[0].mxu0 %v241
    %v414 = vpop.f32.mrb[0].mxu0
    %v415 = vadd.f32 0.0, %v414
    %v416 = vpop.f32.mrb[0].mxu0
    %417 = vdwg.mxu0
    %s418 = scalar_lea.vmem [#allocation2], 32
    %419 = vst.msk [vmem:[%s418] sm:$0xff] %vm328, %v400
    %420 = vst.msk [vmem:[%s418 + $0x8] sm:$0xff] %vm328, %v405
    %421 = vst.msk [vmem:[%s418 + $0x10] sm:$0xff] %vm328, %v410
    %422 = vst.msk [vmem:[%s418 + $0x18] sm:$0xff] %vm328, %v415
    %423 = vmatprep.subr.mxu0 0.0
    %424 = vmatpush1.msra.mxu0 %v169
    %425 = vmatprep.subr.mxu0 0.0
    %426 = vmatpush1.msra.mxu0 %v174
    %427 = vmatprep.subr.mxu0 0.0
    %428 = vmatpush1.msra.mxu0 0.0
    %429 = vmatprep.subr.mxu0 0.0
    %430 = vmatpush1.msra.mxu0 0.0
    %431 = vmatprep.subr.mxu0 0.0
    %432 = vmatpush1.msra.mxu0 0.0
    %433 = vmatprep.subr.mxu0 0.0
    %434 = vmatpush1.msra.mxu0 0.0
    %435 = vmatprep.subr.mxu0 0.0
    %436 = vmatpush1.msra.mxu0 0.0
    %437 = vmatprep.subr.mxu0 0.0
    %438 = vmatpush1.msra.mxu0 0.0
    %439 = vmatprep.subr.mxu0 0.0
    %440 = vmatpush1.msra.mxu0 0.0
    %441 = vmatprep.subr.mxu0 0.0
    %442 = vmatpush1.msra.mxu0 0.0
    %443 = vmatprep.subr.mxu0 0.0
    %444 = vmatpush1.msra.mxu0 0.0
    %445 = vmatprep.subr.mxu0 0.0
    %446 = vmatpush1.msra.mxu0 0.0
    %447 = vmatprep.subr.mxu0 0.0
    %448 = vmatpush1.msra.mxu0 0.0
    %449 = vmatprep.subr.mxu0 0.0
    %450 = vmatpush1.msra.mxu0 0.0
    %451 = vmatprep.subr.mxu0 0.0
    %452 = vmatpush1.msra.mxu0 0.0
    %453 = vmatprep.subr.mxu0 0.0
    %454 = vmatpush1.msra.mxu0 0.0
    %455 = vmatprep.subr.mxu0 0.0
    %456 = vmatpush1.msra.mxu0 0.0
    %457 = vmatprep.subr.mxu0 0.0
    %458 = vmatpush1.msra.mxu0 0.0
    %459 = vmatprep.subr.mxu0 0.0
    %460 = vmatpush1.msra.mxu0 0.0
    %461 = vmatprep.subr.mxu0 0.0
    %462 = vmatpush1.msra.mxu0 0.0
    %463 = vmatprep.subr.mxu0 0.0
    %464 = vmatpush1.msra.mxu0 0.0
    %465 = vmatprep.subr.mxu0 0.0
    %466 = vmatpush1.msra.mxu0 0.0
    %467 = vmatprep.subr.mxu0 0.0
    %468 = vmatpush1.msra.mxu0 0.0
    %469 = vmatprep.subr.mxu0 0.0
    %470 = vmatpush1.msra.mxu0 0.0
    %471 = vmatprep.subr.mxu0 0.0
    %472 = vmatpush1.msra.mxu0 0.0
    %473 = vmatprep.subr.mxu0 0.0
    %474 = vmatpush1.msra.mxu0 0.0
    %475 = vmatprep.subr.mxu0 0.0
    %476 = vmatpush1.msra.mxu0 0.0
    %477 = vmatprep.subr.mxu0 0.0
    %478 = vmatpush1.msra.mxu0 0.0
    %479 = vmatprep.subr.mxu0 0.0
    %480 = vmatpush1.msra.mxu0 0.0
    %481 = vmatprep.subr.mxu0 0.0
    %482 = vmatpush1.msra.mxu0 0.0
    %483 = vmatprep.subr.mxu0 0.0
    %484 = vmatpush1.msra.mxu0 0.0
    %485 = vmatprep.subr.mxu0 0.0
    %486 = vmatpush1.msra.mxu0 0.0
    %487 = vmatprep.mubr.f32.mxu0 0.0
    %488 = vmatmul.mubr.f32.gmra.mrb[0].mxu0 %v232
    %v489 = vpop.f32.mrb[0].mxu0
    %v490 = vadd.f32 0.0, %v489
    %v491 = vpop.f32.mrb[0].mxu0
    %492 = vmatprep.mubr.f32.mxu0 0.0
    %493 = vmatmul.mubr.f32.gmra.mrb[0].mxu0 %v235
    %v494 = vpop.f32.mrb[0].mxu0
    %v495 = vadd.f32 0.0, %v494
    %v496 = vpop.f32.mrb[0].mxu0
    %497 = vmatprep.mubr.f32.mxu0 0.0
    %498 = vmatmul.mubr.f32.gmra.mrb[0].mxu0 %v238
    %v499 = vpop.f32.mrb[0].mxu0
    %v500 = vadd.f32 0.0, %v499
    %v501 = vpop.f32.mrb[0].mxu0
    %502 = vmatprep.mubr.f32.mxu0 0.0
    %503 = vmatmul.mubr.f32.gmra.mrb[0].mxu0 %v241
    %v504 = vpop.f32.mrb[0].mxu0
    %v505 = vadd.f32 0.0, %v504
    %v506 = vpop.f32.mrb[0].mxu0
    %507 = vdwg.mxu0
    %s508 = scalar_lea.vmem [#allocation2], 64
    %509 = vst.msk [vmem:[%s508] sm:$0xff] %vm328, %v490
    %510 = vst.msk [vmem:[%s508 + $0x8] sm:$0xff] %vm328, %v495
    %511 = vst.msk [vmem:[%s508 + $0x10] sm:$0xff] %vm328, %v500
    %512 = vst.msk [vmem:[%s508 + $0x18] sm:$0xff] %vm328, %v505
    %513 = vmatprep.subr.mxu0 0.0
    %514 = vmatpush1.msra.mxu0 %v179
    %515 = vmatprep.subr.mxu0 0.0
    %516 = vmatpush1.msra.mxu0 %v184
    %517 = vmatprep.subr.mxu0 0.0
    %518 = vmatpush1.msra.mxu0 0.0
    %519 = vmatprep.subr.mxu0 0.0
    %520 = vmatpush1.msra.mxu0 0.0
    %521 = vmatprep.subr.mxu0 0.0
    %522 = vmatpush1.msra.mxu0 0.0
    %523 = vmatprep.subr.mxu0 0.0
    %524 = vmatpush1.msra.mxu0 0.0
    %525 = vmatprep.subr.mxu0 0.0
    %526 = vmatpush1.msra.mxu0 0.0
    %527 = vmatprep.subr.mxu0 0.0
    %528 = vmatpush1.msra.mxu0 0.0
    %529 = vmatprep.subr.mxu0 0.0
    %530 = vmatpush1.msra.mxu0 0.0
    %531 = vmatprep.subr.mxu0 0.0
    %532 = vmatpush1.msra.mxu0 0.0
    %533 = vmatprep.subr.mxu0 0.0
    %534 = vmatpush1.msra.mxu0 0.0
    %535 = vmatprep.subr.mxu0 0.0
    %536 = vmatpush1.msra.mxu0 0.0
    %537 = vmatprep.subr.mxu0 0.0
    %538 = vmatpush1.msra.mxu0 0.0
    %539 = vmatprep.subr.mxu0 0.0
    %540 = vmatpush1.msra.mxu0 0.0
    %541 = vmatprep.subr.mxu0 0.0
    %542 = vmatpush1.msra.mxu0 0.0
    %543 = vmatprep.subr.mxu0 0.0
    %544 = vmatpush1.msra.mxu0 0.0
    %545 = vmatprep.subr.mxu0 0.0
    %546 = vmatpush1.msra.mxu0 0.0
    %547 = vmatprep.subr.mxu0 0.0
    %548 = vmatpush1.msra.mxu0 0.0
    %549 = vmatprep.subr.mxu0 0.0
    %550 = vmatpush1.msra.mxu0 0.0
    %551 = vmatprep.subr.mxu0 0.0
    %552 = vmatpush1.msra.mxu0 0.0
    %553 = vmatprep.subr.mxu0 0.0
    %554 = vmatpush1.msra.mxu0 0.0
    %555 = vmatprep.subr.mxu0 0.0
    %556 = vmatpush1.msra.mxu0 0.0
    %557 = vmatprep.subr.mxu0 0.0
    %558 = vmatpush1.msra.mxu0 0.0
    %559 = vmatprep.subr.mxu0 0.0
    %560 = vmatpush1.msra.mxu0 0.0
    %561 = vmatprep.subr.mxu0 0.0
    %562 = vmatpush1.msra.mxu0 0.0
    %563 = vmatprep.subr.mxu0 0.0
    %564 = vmatpush1.msra.mxu0 0.0
    %565 = vmatprep.subr.mxu0 0.0
    %566 = vmatpush1.msra.mxu0 0.0
    %567 = vmatprep.subr.mxu0 0.0
    %568 = vmatpush1.msra.mxu0 0.0
    %569 = vmatprep.subr.mxu0 0.0
    %570 = vmatpush1.msra.mxu0 0.0
    %571 = vmatprep.subr.mxu0 0.0
    %572 = vmatpush1.msra.mxu0 0.0
    %573 = vmatprep.subr.mxu0 0.0
    %574 = vmatpush1.msra.mxu0 0.0
    %575 = vmatprep.subr.mxu0 0.0
    %576 = vmatpush1.msra.mxu0 0.0
    %577 = vmatprep.mubr.f32.mxu0 0.0
    %578 = vmatmul.mubr.f32.gmra.mrb[0].mxu0 %v232
    %v579 = vpop.f32.mrb[0].mxu0
    %v580 = vadd.f32 0.0, %v579
    %v581 = vpop.f32.mrb[0].mxu0
    %582 = vmatprep.mubr.f32.mxu0 0.0
    %583 = vmatmul.mubr.f32.gmra.mrb[0].mxu0 %v235
    %v584 = vpop.f32.mrb[0].mxu0
    %v585 = vadd.f32 0.0, %v584
    %v586 = vpop.f32.mrb[0].mxu0
    %587 = vmatprep.mubr.f32.mxu0 0.0
    %588 = vmatmul.mubr.f32.gmra.mrb[0].mxu0 %v238
    %v589 = vpop.f32.mrb[0].mxu0
    %v590 = vadd.f32 0.0, %v589
    %v591 = vpop.f32.mrb[0].mxu0
    %592 = vmatprep.mubr.f32.mxu0 0.0
    %593 = vmatmul.mubr.f32.gmra.mrb[0].mxu0 %v241
    %v594 = vpop.f32.mrb[0].mxu0
    %v595 = vadd.f32 0.0, %v594
    %v596 = vpop.f32.mrb[0].mxu0
    %597 = vdwg.mxu0
    %s598 = scalar_lea.vmem [#allocation2], 96
    %599 = vst.msk [vmem:[%s598] sm:$0xff] %vm328, %v580
    %600 = vst.msk [vmem:[%s598 + $0x8] sm:$0xff] %vm328, %v585
    %601 = vst.msk [vmem:[%s598 + $0x10] sm:$0xff] %vm328, %v590
    %602 = vst.msk [vmem:[%s598 + $0x18] sm:$0xff] %vm328, %v595
    %603 = vmatprep.subr.mxu0 0.0
    %604 = vmatpush1.msra.mxu0 %v189
    %605 = vmatprep.subr.mxu0 0.0
    %606 = vmatpush1.msra.mxu0 %v194
    %607 = vmatprep.subr.mxu0 0.0
    %608 = vmatpush1.msra.mxu0 0.0
    %609 = vmatprep.subr.mxu0 0.0
    %610 = vmatpush1.msra.mxu0 0.0
    %611 = vmatprep.subr.mxu0 0.0
    %612 = vmatpush1.msra.mxu0 0.0
    %613 = vmatprep.subr.mxu0 0.0
    %614 = vmatpush1.msra.mxu0 0.0
    %615 = vmatprep.subr.mxu0 0.0
    %616 = vmatpush1.msra.mxu0 0.0
    %617 = vmatprep.subr.mxu0 0.0
    %618 = vmatpush1.msra.mxu0 0.0
    %619 = vmatprep.subr.mxu0 0.0
    %620 = vmatpush1.msra.mxu0 0.0
    %621 = vmatprep.subr.mxu0 0.0
    %622 = vmatpush1.msra.mxu0 0.0
    %623 = vmatprep.subr.mxu0 0.0
    %624 = vmatpush1.msra.mxu0 0.0
    %625 = vmatprep.subr.mxu0 0.0
    %626 = vmatpush1.msra.mxu0 0.0
    %627 = vmatprep.subr.mxu0 0.0
    %628 = vmatpush1.msra.mxu0 0.0
    %629 = vmatprep.subr.mxu0 0.0
    %630 = vmatpush1.msra.mxu0 0.0
    %631 = vmatprep.subr.mxu0 0.0
    %632 = vmatpush1.msra.mxu0 0.0
    %633 = vmatprep.subr.mxu0 0.0
    %634 = vmatpush1.msra.mxu0 0.0
    %635 = vmatprep.subr.mxu0 0.0
    %636 = vmatpush1.msra.mxu0 0.0
    %637 = vmatprep.subr.mxu0 0.0
    %638 = vmatpush1.msra.mxu0 0.0
    %639 = vmatprep.subr.mxu0 0.0
    %640 = vmatpush1.msra.mxu0 0.0
    %641 = vmatprep.subr.mxu0 0.0
    %642 = vmatpush1.msra.mxu0 0.0
    %643 = vmatprep.subr.mxu0 0.0
    %644 = vmatpush1.msra.mxu0 0.0
    %645 = vmatprep.subr.mxu0 0.0
    %646 = vmatpush1.msra.mxu0 0.0
    %647 = vmatprep.subr.mxu0 0.0
    %648 = vmatpush1.msra.mxu0 0.0
    %649 = vmatprep.subr.mxu0 0.0
    %650 = vmatpush1.msra.mxu0 0.0
    %651 = vmatprep.subr.mxu0 0.0
    %652 = vmatpush1.msra.mxu0 0.0
    %653 = vmatprep.subr.mxu0 0.0
    %654 = vmatpush1.msra.mxu0 0.0
    %655 = vmatprep.subr.mxu0 0.0
    %656 = vmatpush1.msra.mxu0 0.0
    %657 = vmatprep.subr.mxu0 0.0
    %658 = vmatpush1.msra.mxu0 0.0
    %659 = vmatprep.subr.mxu0 0.0
    %660 = vmatpush1.msra.mxu0 0.0
    %661 = vmatprep.subr.mxu0 0.0
    %662 = vmatpush1.msra.mxu0 0.0
    %663 = vmatprep.subr.mxu0 0.0
    %664 = vmatpush1.msra.mxu0 0.0
    %665 = vmatprep.subr.mxu0 0.0
    %666 = vmatpush1.msra.mxu0 0.0
    %667 = vmatprep.mubr.f32.mxu0 0.0
    %668 = vmatmul.mubr.f32.gmra.mrb[0].mxu0 %v232
    %v669 = vpop.f32.mrb[0].mxu0
    %v670 = vadd.f32 0.0, %v669
    %v671 = vpop.f32.mrb[0].mxu0
    %672 = vmatprep.mubr.f32.mxu0 0.0
    %673 = vmatmul.mubr.f32.gmra.mrb[0].mxu0 %v235
    %v674 = vpop.f32.mrb[0].mxu0
    %v675 = vadd.f32 0.0, %v674
    %v676 = vpop.f32.mrb[0].mxu0
    %677 = vmatprep.mubr.f32.mxu0 0.0
    %678 = vmatmul.mubr.f32.gmra.mrb[0].mxu0 %v238
    %v679 = vpop.f32.mrb[0].mxu0
    %v680 = vadd.f32 0.0, %v679
    %v681 = vpop.f32.mrb[0].mxu0
    %682 = vmatprep.mubr.f32.mxu0 0.0
    %683 = vmatmul.mubr.f32.gmra.mrb[0].mxu0 %v241
    %v684 = vpop.f32.mrb[0].mxu0
    %v685 = vadd.f32 0.0, %v684
    %v686 = vpop.f32.mrb[0].mxu0
    %687 = vdwg.mxu0
    %s688 = scalar_lea.vmem [#allocation2], 128
    %689 = vst.msk [vmem:[%s688] sm:$0xff] %vm328, %v670
    %690 = vst.msk [vmem:[%s688 + $0x8] sm:$0xff] %vm328, %v675
    %691 = vst.msk [vmem:[%s688 + $0x10] sm:$0xff] %vm328, %v680
    %692 = vst.msk [vmem:[%s688 + $0x18] sm:$0xff] %vm328, %v685
    %693 = vmatprep.subr.mxu0 0.0
    %694 = vmatpush1.msra.mxu0 %v199
    %695 = vmatprep.subr.mxu0 0.0
    %696 = vmatpush1.msra.mxu0 %v204
    %697 = vmatprep.subr.mxu0 0.0
    %698 = vmatpush1.msra.mxu0 0.0
    %699 = vmatprep.subr.mxu0 0.0
    %700 = vmatpush1.msra.mxu0 0.0
    %701 = vmatprep.subr.mxu0 0.0
    %702 = vmatpush1.msra.mxu0 0.0
    %703 = vmatprep.subr.mxu0 0.0
    %704 = vmatpush1.msra.mxu0 0.0
    %705 = vmatprep.subr.mxu0 0.0
    %706 = vmatpush1.msra.mxu0 0.0
    %707 = vmatprep.subr.mxu0 0.0
    %708 = vmatpush1.msra.mxu0 0.0
    %709 = vmatprep.subr.mxu0 0.0
    %710 = vmatpush1.msra.mxu0 0.0
    %711 = vmatprep.subr.mxu0 0.0
    %712 = vmatpush1.msra.mxu0 0.0
    %713 = vmatprep.subr.mxu0 0.0
    %714 = vmatpush1.msra.mxu0 0.0
    %715 = vmatprep.subr.mxu0 0.0
    %716 = vmatpush1.msra.mxu0 0.0
    %717 = vmatprep.subr.mxu0 0.0
    %718 = vmatpush1.msra.mxu0 0.0
    %719 = vmatprep.subr.mxu0 0.0
    %720 = vmatpush1.msra.mxu0 0.0
    %721 = vmatprep.subr.mxu0 0.0
    %722 = vmatpush1.msra.mxu0 0.0
    %723 = vmatprep.subr.mxu0 0.0
    %724 = vmatpush1.msra.mxu0 0.0
    %725 = vmatprep.subr.mxu0 0.0
    %726 = vmatpush1.msra.mxu0 0.0
    %727 = vmatprep.subr.mxu0 0.0
    %728 = vmatpush1.msra.mxu0 0.0
    %729 = vmatprep.subr.mxu0 0.0
    %730 = vmatpush1.msra.mxu0 0.0
    %731 = vmatprep.subr.mxu0 0.0
    %732 = vmatpush1.msra.mxu0 0.0
    %733 = vmatprep.subr.mxu0 0.0
    %734 = vmatpush1.msra.mxu0 0.0
    %735 = vmatprep.subr.mxu0 0.0
    %736 = vmatpush1.msra.mxu0 0.0
    %737 = vmatprep.subr.mxu0 0.0
    %738 = vmatpush1.msra.mxu0 0.0
    %739 = vmatprep.subr.mxu0 0.0
    %740 = vmatpush1.msra.mxu0 0.0
    %741 = vmatprep.subr.mxu0 0.0
    %742 = vmatpush1.msra.mxu0 0.0
    %743 = vmatprep.subr.mxu0 0.0
    %744 = vmatpush1.msra.mxu0 0.0
    %745 = vmatprep.subr.mxu0 0.0
    %746 = vmatpush1.msra.mxu0 0.0
    %747 = vmatprep.subr.mxu0 0.0
    %748 = vmatpush1.msra.mxu0 0.0
    %749 = vmatprep.subr.mxu0 0.0
    %750 = vmatpush1.msra.mxu0 0.0
    %751 = vmatprep.subr.mxu0 0.0
    %752 = vmatpush1.msra.mxu0 0.0
    %753 = vmatprep.subr.mxu0 0.0
    %754 = vmatpush1.msra.mxu0 0.0
    %755 = vmatprep.subr.mxu0 0.0
    %756 = vmatpush1.msra.mxu0 0.0
    %757 = vmatprep.mubr.f32.mxu0 0.0
    %758 = vmatmul.mubr.f32.gmra.mrb[0].mxu0 %v232
    %v759 = vpop.f32.mrb[0].mxu0
    %v760 = vadd.f32 0.0, %v759
    %v761 = vpop.f32.mrb[0].mxu0
    %762 = vmatprep.mubr.f32.mxu0 0.0
    %763 = vmatmul.mubr.f32.gmra.mrb[0].mxu0 %v235
    %v764 = vpop.f32.mrb[0].mxu0
    %v765 = vadd.f32 0.0, %v764
    %v766 = vpop.f32.mrb[0].mxu0
    %767 = vmatprep.mubr.f32.mxu0 0.0
    %768 = vmatmul.mubr.f32.gmra.mrb[0].mxu0 %v238
    %v769 = vpop.f32.mrb[0].mxu0
    %v770 = vadd.f32 0.0, %v769
    %v771 = vpop.f32.mrb[0].mxu0
    %772 = vmatprep.mubr.f32.mxu0 0.0
    %773 = vmatmul.mubr.f32.gmra.mrb[0].mxu0 %v241
    %v774 = vpop.f32.mrb[0].mxu0
    %v775 = vadd.f32 0.0, %v774
    %v776 = vpop.f32.mrb[0].mxu0
    %777 = vdwg.mxu0
    %s778 = scalar_lea.vmem [#allocation2], 160
    %779 = vst.msk [vmem:[%s778] sm:$0xff] %vm328, %v760
    %780 = vst.msk [vmem:[%s778 + $0x8] sm:$0xff] %vm328, %v765
    %781 = vst.msk [vmem:[%s778 + $0x10] sm:$0xff] %vm328, %v770
    %782 = vst.msk [vmem:[%s778 + $0x18] sm:$0xff] %vm328, %v775
    %783 = vmatprep.subr.mxu0 0.0
    %784 = vmatpush1.msra.mxu0 %v209
    %785 = vmatprep.subr.mxu0 0.0
    %786 = vmatpush1.msra.mxu0 %v214
    %787 = vmatprep.subr.mxu0 0.0
    %788 = vmatpush1.msra.mxu0 0.0
    %789 = vmatprep.subr.mxu0 0.0
    %790 = vmatpush1.msra.mxu0 0.0
    %791 = vmatprep.subr.mxu0 0.0
    %792 = vmatpush1.msra.mxu0 0.0
    %793 = vmatprep.subr.mxu0 0.0
    %794 = vmatpush1.msra.mxu0 0.0
    %795 = vmatprep.subr.mxu0 0.0
    %796 = vmatpush1.msra.mxu0 0.0
    %797 = vmatprep.subr.mxu0 0.0
    %798 = vmatpush1.msra.mxu0 0.0
    %799 = vmatprep.subr.mxu0 0.0
    %800 = vmatpush1.msra.mxu0 0.0
    %801 = vmatprep.subr.mxu0 0.0
    %802 = vmatpush1.msra.mxu0 0.0
    %803 = vmatprep.subr.mxu0 0.0
    %804 = vmatpush1.msra.mxu0 0.0
    %805 = vmatprep.subr.mxu0 0.0
    %806 = vmatpush1.msra.mxu0 0.0
    %807 = vmatprep.subr.mxu0 0.0
    %808 = vmatpush1.msra.mxu0 0.0
    %809 = vmatprep.subr.mxu0 0.0
    %810 = vmatpush1.msra.mxu0 0.0
    %811 = vmatprep.subr.mxu0 0.0
    %812 = vmatpush1.msra.mxu0 0.0
    %813 = vmatprep.subr.mxu0 0.0
    %814 = vmatpush1.msra.mxu0 0.0
    %815 = vmatprep.subr.mxu0 0.0
    %816 = vmatpush1.msra.mxu0 0.0
    %817 = vmatprep.subr.mxu0 0.0
    %818 = vmatpush1.msra.mxu0 0.0
    %819 = vmatprep.subr.mxu0 0.0
    %820 = vmatpush1.msra.mxu0 0.0
    %821 = vmatprep.subr.mxu0 0.0
    %822 = vmatpush1.msra.mxu0 0.0
    %823 = vmatprep.subr.mxu0 0.0
    %824 = vmatpush1.msra.mxu0 0.0
    %825 = vmatprep.subr.mxu0 0.0
    %826 = vmatpush1.msra.mxu0 0.0
    %827 = vmatprep.subr.mxu0 0.0
    %828 = vmatpush1.msra.mxu0 0.0
    %829 = vmatprep.subr.mxu0 0.0
    %830 = vmatpush1.msra.mxu0 0.0
    %831 = vmatprep.subr.mxu0 0.0
    %832 = vmatpush1.msra.mxu0 0.0
    %833 = vmatprep.subr.mxu0 0.0
    %834 = vmatpush1.msra.mxu0 0.0
    %835 = vmatprep.subr.mxu0 0.0
    %836 = vmatpush1.msra.mxu0 0.0
    %837 = vmatprep.subr.mxu0 0.0
    %838 = vmatpush1.msra.mxu0 0.0
    %839 = vmatprep.subr.mxu0 0.0
    %840 = vmatpush1.msra.mxu0 0.0
    %841 = vmatprep.subr.mxu0 0.0
    %842 = vmatpush1.msra.mxu0 0.0
    %843 = vmatprep.subr.mxu0 0.0
    %844 = vmatpush1.msra.mxu0 0.0
    %845 = vmatprep.subr.mxu0 0.0
    %846 = vmatpush1.msra.mxu0 0.0
    %847 = vmatprep.mubr.f32.mxu0 0.0
    %848 = vmatmul.mubr.f32.gmra.mrb[0].mxu0 %v232
    %v849 = vpop.f32.mrb[0].mxu0
    %v850 = vadd.f32 0.0, %v849
    %v851 = vpop.f32.mrb[0].mxu0
    %852 = vmatprep.mubr.f32.mxu0 0.0
    %853 = vmatmul.mubr.f32.gmra.mrb[0].mxu0 %v235
    %v854 = vpop.f32.mrb[0].mxu0
    %v855 = vadd.f32 0.0, %v854
    %v856 = vpop.f32.mrb[0].mxu0
    %857 = vmatprep.mubr.f32.mxu0 0.0
    %858 = vmatmul.mubr.f32.gmra.mrb[0].mxu0 %v238
    %v859 = vpop.f32.mrb[0].mxu0
    %v860 = vadd.f32 0.0, %v859
    %v861 = vpop.f32.mrb[0].mxu0
    %862 = vmatprep.mubr.f32.mxu0 0.0
    %863 = vmatmul.mubr.f32.gmra.mrb[0].mxu0 %v241
    %v864 = vpop.f32.mrb[0].mxu0
    %v865 = vadd.f32 0.0, %v864
    %v866 = vpop.f32.mrb[0].mxu0
    %867 = vdwg.mxu0
    %s868 = scalar_lea.vmem [#allocation2], 192
    %869 = vst.msk [vmem:[%s868] sm:$0xff] %vm328, %v850
    %870 = vst.msk [vmem:[%s868 + $0x8] sm:$0xff] %vm328, %v855
    %871 = vst.msk [vmem:[%s868 + $0x10] sm:$0xff] %vm328, %v860
    %872 = vst.msk [vmem:[%s868 + $0x18] sm:$0xff] %vm328, %v865
    %873 = vmatprep.subr.mxu0 0.0
    %874 = vmatpush1.msra.mxu0 %v219
    %875 = vmatprep.subr.mxu0 0.0
    %876 = vmatpush1.msra.mxu0 %v224
    %877 = vmatprep.subr.mxu0 0.0
    %878 = vmatpush1.msra.mxu0 0.0
    %879 = vmatprep.subr.mxu0 0.0
    %880 = vmatpush1.msra.mxu0 0.0
    %881 = vmatprep.subr.mxu0 0.0
    %882 = vmatpush1.msra.mxu0 0.0
    %883 = vmatprep.subr.mxu0 0.0
    %884 = vmatpush1.msra.mxu0 0.0
    %885 = vmatprep.subr.mxu0 0.0
    %886 = vmatpush1.msra.mxu0 0.0
    %887 = vmatprep.subr.mxu0 0.0
    %888 = vmatpush1.msra.mxu0 0.0
    %889 = vmatprep.subr.mxu0 0.0
    %890 = vmatpush1.msra.mxu0 0.0
    %891 = vmatprep.subr.mxu0 0.0
    %892 = vmatpush1.msra.mxu0 0.0
    %893 = vmatprep.subr.mxu0 0.0
    %894 = vmatpush1.msra.mxu0 0.0
    %895 = vmatprep.subr.mxu0 0.0
    %896 = vmatpush1.msra.mxu0 0.0
    %897 = vmatprep.subr.mxu0 0.0
    %898 = vmatpush1.msra.mxu0 0.0
    %899 = vmatprep.subr.mxu0 0.0
    %900 = vmatpush1.msra.mxu0 0.0
    %901 = vmatprep.subr.mxu0 0.0
    %902 = vmatpush1.msra.mxu0 0.0
    %903 = vmatprep.subr.mxu0 0.0
    %904 = vmatpush1.msra.mxu0 0.0
    %905 = vmatprep.subr.mxu0 0.0
    %906 = vmatpush1.msra.mxu0 0.0
    %907 = vmatprep.subr.mxu0 0.0
    %908 = vmatpush1.msra.mxu0 0.0
    %909 = vmatprep.subr.mxu0 0.0
    %910 = vmatpush1.msra.mxu0 0.0
    %911 = vmatprep.subr.mxu0 0.0
    %912 = vmatpush1.msra.mxu0 0.0
    %913 = vmatprep.subr.mxu0 0.0
    %914 = vmatpush1.msra.mxu0 0.0
    %915 = vmatprep.subr.mxu0 0.0
    %916 = vmatpush1.msra.mxu0 0.0
    %917 = vmatprep.subr.mxu0 0.0
    %918 = vmatpush1.msra.mxu0 0.0
    %919 = vmatprep.subr.mxu0 0.0
    %920 = vmatpush1.msra.mxu0 0.0
    %921 = vmatprep.subr.mxu0 0.0
    %922 = vmatpush1.msra.mxu0 0.0
    %923 = vmatprep.subr.mxu0 0.0
    %924 = vmatpush1.msra.mxu0 0.0
    %925 = vmatprep.subr.mxu0 0.0
    %926 = vmatpush1.msra.mxu0 0.0
    %927 = vmatprep.subr.mxu0 0.0
    %928 = vmatpush1.msra.mxu0 0.0
    %929 = vmatprep.subr.mxu0 0.0
    %930 = vmatpush1.msra.mxu0 0.0
    %931 = vmatprep.subr.mxu0 0.0
    %932 = vmatpush1.msra.mxu0 0.0
    %933 = vmatprep.subr.mxu0 0.0
    %934 = vmatpush1.msra.mxu0 0.0
    %935 = vmatprep.subr.mxu0 0.0
    %936 = vmatpush1.msra.mxu0 0.0
    %937 = vmatprep.mubr.f32.mxu0 0.0
    %938 = vmatmul.mubr.f32.gmra.mrb[0].mxu0 %v232
    %v939 = vpop.f32.mrb[0].mxu0
    %v940 = vadd.f32 0.0, %v939
    %v941 = vpop.f32.mrb[0].mxu0
    %942 = vmatprep.mubr.f32.mxu0 0.0
    %943 = vmatmul.mubr.f32.gmra.mrb[0].mxu0 %v235
    %v944 = vpop.f32.mrb[0].mxu0
    %v945 = vadd.f32 0.0, %v944
    %v946 = vpop.f32.mrb[0].mxu0
    %947 = vmatprep.mubr.f32.mxu0 0.0
    %948 = vmatmul.mubr.f32.gmra.mrb[0].mxu0 %v238
    %v949 = vpop.f32.mrb[0].mxu0
    %v950 = vadd.f32 0.0, %v949
    %v951 = vpop.f32.mrb[0].mxu0
    %952 = vmatprep.mubr.f32.mxu0 0.0
    %953 = vmatmul.mubr.f32.gmra.mrb[0].mxu0 %v241
    %v954 = vpop.f32.mrb[0].mxu0
    %v955 = vadd.f32 0.0, %v954
    %v956 = vpop.f32.mrb[0].mxu0
    %957 = vdwg.mxu0
    %s958 = scalar_lea.vmem [#allocation2], 224
    %959 = vst.msk [vmem:[%s958] sm:$0xff] %vm328, %v940
    %960 = vst.msk [vmem:[%s958 + $0x8] sm:$0xff] %vm328, %v945
    %961 = vst.msk [vmem:[%s958 + $0x10] sm:$0xff] %vm328, %v950
    %962 = vst.msk [vmem:[%s958 + $0x18] sm:$0xff] %vm328, %v955
    // Predicated region
    $region14: #{_interpolate_safe.1} parent=1 // pred_check
      _
    $region15: #{_interpolate_safe.1} parent=1 // pred_check_branch
      %964 = sbr.rel (0) target = $region17
    $region16: #{_interpolate_safe.1} parent=1 // pred_region
      %s966 = ssub.s32 4096, 4096
      %967 = vsyncadd [#allocation3], %s966
      %s968 = sshll.u32 [#allocation2], 4
      %s969 = int_to_ptr.vmem [resolvable:$true] %s968
      %974 = dma.vmem_to_hbm [thread:$0]  %s969, 4096, %s3, [#allocation3], 128, 128, 8
    $region17: #{_interpolate_safe.1} parent=1 // pred_fallthru
      _
    // Predicated region
    $region18: #{_interpolate_safe.1} parent=1 // pred_check
      _
    $region19: #{_interpolate_safe.1} parent=1 // pred_check_branch
      %976 = sbr.rel (0) target = $region21
    $region20: #{_interpolate_safe.1} parent=1 // pred_region
      %977 = dma.done [#allocation3], 4096
    $region21: #{_interpolate_safe.1} parent=1 // pred_fallthru
      _
    %978 = vsyncpa [#allocation3], 1

</llo_original>
